<compile_context>
chip_gen: v7x
topology: tpu7x:2x2x1
jax: 0.10.0
libtpu: 0.0.40
codegen_flags: <defaults>
</compile_context>

<pallas_src>
import functools

import jax
import jax.numpy as jnp
from jax.experimental import pallas as pl
from jax.experimental.pallas import tpu as pltpu

LANE = 128
_VMEM_LIMIT_BYTES = 48 * 1024 * 1024      # < 64 MiB v7x physical, > 32 MiB default scoped
_G_RESIDENT_BYTES = 12 * 1024 * 1024      # keep the XW operand VMEM-resident below this


def _round_up(v, m):
    return ((v + m - 1) // m) * m


def _plan_tiles(n, tile_m, tile_k):
    """Node padding and tile sizes.

    Returns (n_pad, tm, tk) with tm | n_pad, tk a multiple of tm, tk | n_pad.
    Pads n up to a multiple of tm (cheap, O(tile*N) extra bytes) instead of
    shrinking the tile to a divisor of a 128-rounded N.
    """
    n128 = _round_up(max(n, 1), LANE)
    tm = max(LANE, min((tile_m // LANE) * LANE, n128))
    # Keep >= 2 row tiles when possible so the "parallel" axis spans both v7x TCs.
    if n128 >= 2 * LANE:
        tm = min(tm, max(LANE, ((n128 // 2) // LANE) * LANE))
    n_pad = _round_up(n128, tm)
    blocks = n_pad // tm
    mult = 1
    for m in range(1, blocks + 1):
        if blocks % m == 0 and m * tm <= max(tile_k, tm):
            mult = m
    return n_pad, tm, mult * tm


# --------------------------- Pallas kernels -------------------------------- #
def _xw_kernel(x_ref, w_ref, dinv_ref, o_ref):
    """g0 = D^{-1/2} (X @ W0), one row tile.  x f32, w bf16, out bf16."""
    xw = jnp.dot(x_ref[...].astype(jnp.bfloat16), w_ref[...],
                 preferred_element_type=jnp.float32)
    o_ref[...] = (dinv_ref[...] * xw).astype(o_ref.dtype)


def _scaled_xw(x_pad, w_bf, dinv2d, *, tile_m):
    n_pad, fin = x_pad.shape
    fout_pad = w_bf.shape[1]
    grid_m = n_pad // tile_m
    return pl.pallas_call(
        _xw_kernel,
        out_shape=jax.ShapeDtypeStruct((n_pad, fout_pad), jnp.bfloat16),
        grid_spec=pltpu.PrefetchScalarGridSpec(
            num_scalar_prefetch=0,
            grid=(grid_m,),
            in_specs=[
                pl.BlockSpec((tile_m, fin), lambda i: (i, 0)),      # fin unpadded (full dim)
                pl.BlockSpec((fin, fout_pad), lambda i: (0, 0)),
                pl.BlockSpec((tile_m, 1), lambda i: (i, 0)),
            ],
            out_specs=pl.BlockSpec((tile_m, fout_pad), lambda i: (i, 0)),
        ),
        compiler_params=pltpu.CompilerParams(
            dimension_semantics=("parallel",),
            vmem_limit_bytes=_VMEM_LIMIT_BYTES,
        ),
    )(x_pad, w_bf, dinv2d)


def _make_agg1_kernel(tile_k, g_resident):
    """Layer 1 aggregation fused with layer 2's X@W.

    acc += (A+I)_tile @ g0_slab   (int8->bf16 exact cast, f32 accumulate)
    finalize: h = relu(dinv*acc + b0);  out = (dinv * (h @ W1)).astype(bf16)
    """
    def kernel(a_ref, g_ref, dinv_ref, b_ref, w1_ref, o_ref, acc_ref):
        k = pl.program_id(1)

        @pl.when(k == 0)
        def _init():
            acc_ref[...] = jnp.zeros_like(acc_ref)

        if g_resident:
            g = g_ref[pl.ds(pl.multiple_of(k * tile_k, tile_k), tile_k), :]
        else:
            g = g_ref[...]
        acc_ref[...] += jnp.dot(a_ref[...].astype(jnp.bfloat16), g,
                                preferred_element_type=jnp.float32)

        @pl.when(k == pl.num_programs(1) - 1)
        def _finalize():
            dinv = dinv_ref[...]
            h = jnp.maximum(dinv * acc_ref[...] + b_ref[...], 0.0)
            hw = jnp.dot(h.astype(jnp.bfloat16), w1_ref[...],
                         preferred_element_type=jnp.float32)
            o_ref[...] = (dinv * hw).astype(o_ref.dtype)

    return kernel


def _make_agg2_kernel(tile_k, g_resident):
    """Layer 2 aggregation: accumulate directly into the f32 output block.

    o += (A+I)_tile @ g1_slab ; finalize: o = relu(dinv*o + b1)
    """
    def kernel(a_ref, g_ref, dinv_ref, b_ref, o_ref):
        k = pl.program_id(1)

        @pl.when(k == 0)
        def _init():
            o_ref[...] = jnp.zeros_like(o_ref)

        if g_resident:
            g = g_ref[pl.ds(pl.multiple_of(k * tile_k, tile_k), tile_k), :]
        else:
            g = g_ref[...]
        o_ref[...] += jnp.dot(a_ref[...].astype(jnp.bfloat16), g,
                              preferred_element_type=jnp.float32)

        @pl.when(k == pl.num_programs(1) - 1)
        def _finalize():
            o_ref[...] = jnp.maximum(dinv_ref[...] * o_ref[...] + b_ref[...], 0.0)

    return kernel


def _agg_layer(ai, g, dinv2d, bias2d, w1_bf, *, tile_m, tile_k, g_resident,
               out_dtype, fused_w1):
    """out = finalize( (A+I) @ g ), k-blocked over the node (contraction) axis."""
    n_pad = ai.shape[0]
    lanes = g.shape[1]
    out_lanes = w1_bf.shape[1] if fused_w1 else lanes
    grid = (n_pad // tile_m, n_pad // tile_k)

    if g_resident:
        g_spec = pl.BlockSpec((n_pad, lanes), lambda i, k: (0, 0))   # DMA once, stays in VMEM
    else:
        g_spec = pl.BlockSpec((tile_k, lanes), lambda i, k: (k, 0))  # stream k-slabs

    in_specs = [
        pl.BlockSpec((tile_m, tile_k), lambda i, k: (i, k)),  # (A+I) int8 tile
        g_spec,
        pl.BlockSpec((tile_m, 1), lambda i, k: (i, 0)),       # D^{-1/2} rows
        pl.BlockSpec((1, lanes), lambda i, k: (0, 0)),        # bias
    ]
    args = [ai, g, dinv2d, bias2d]
    scratch = []
    if fused_w1:
        in_specs.append(pl.BlockSpec(w1_bf.shape, lambda i, k: (0, 0)))  # W1 (constant)
        args.append(w1_bf)
        scratch = [pltpu.VMEM((tile_m, lanes), jnp.float32)]   # f32 acc (output is bf16)
        kernel = _make_agg1_kernel(tile_k, g_resident)
    else:
        kernel = _make_agg2_kernel(tile_k, g_resident)

    return pl.pallas_call(
        kernel,
        out_shape=jax.ShapeDtypeStruct((n_pad, out_lanes), out_dtype),
        grid_spec=pltpu.PrefetchScalarGridSpec(
            num_scalar_prefetch=0,
            grid=grid,
            in_specs=in_specs,
            out_specs=pl.BlockSpec((tile_m, out_lanes), lambda i, k: (i, 0)),
            scratch_shapes=scratch,
        ),
        compiler_params=pltpu.CompilerParams(
            dimension_semantics=("parallel", "arbitrary"),
            vmem_limit_bytes=_VMEM_LIMIT_BYTES,
        ),
    )(*args)


# ------------------------------ JAX glue ------------------------------------ #
def prepare_graph(edge_index, num_nodes, *, tile_m=1024, tile_k=2048):
    """Exact integer (A+I) (padded int8) and f32 D^{-1/2}.  Call once per static graph."""
    n_pad, _, _ = _plan_tiles(num_nodes, tile_m, tile_k)
    src, dst = edge_index[0], edge_index[1]
    adj = jnp.zeros((num_nodes, num_nodes), jnp.float32)
    adj = adj.at[dst, src].set(1.0)
    adj = jnp.maximum(adj, adj.T)                        # undirected (GCA convention)
    ai = adj + jnp.eye(num_nodes, dtype=jnp.float32)     # self-loops
    deg = ai.sum(axis=1)
    dinv = jnp.where(deg > 0, 1.0 / jnp.sqrt(deg), 0.0)
    ai_pad = jnp.pad(ai, ((0, n_pad - num_nodes), (0, n_pad - num_nodes))).astype(jnp.int8)
    dinv_pad = jnp.pad(dinv, (0, n_pad - num_nodes))
    return ai_pad, dinv_pad


def init_encoder_params(key, in_channels, out_channels):
    """k=2, skip=False: conv0: in -> 2*out, conv1: 2*out -> out (Glorot-ish)."""
    k0, k1 = jax.random.split(key)

    def glorot(k, fan_in, fan_out):
        scale = jnp.sqrt(6.0 / (fan_in + fan_out))
        return jax.random.uniform(k, (fan_in, fan_out), jnp.float32, -scale, scale)

    hidden = 2 * out_channels
    return {
        "w0": glorot(k0, in_channels, hidden),
        "b0": jnp.zeros((hidden,), jnp.float32),
        "w1": glorot(k1, hidden, out_channels),
        "b1": jnp.zeros((out_channels,), jnp.float32),
    }


@functools.partial(jax.jit, static_argnames=("tile_m", "tile_k", "g_resident"))
def encoder_forward(params, x, ai_pad, dinv_pad, *, tile_m=1024, tile_k=2048,
                    g_resident=None):
    n, fin = x.shape
    hidden = params["w0"].shape[1]
    fout = params["w1"].shape[1]

    n_pad, tm, tk = _plan_tiles(n, tile_m, tile_k)
    assert ai_pad.shape == (n_pad, n_pad), (
        "prepare_graph() must use a tile plan consistent with encoder_forward()")
    hid_pad = _round_up(hidden, LANE)
    fout_pad = _round_up(fout, LANE)

    if g_resident is None:
        g_resident = n_pad * max(hid_pad, fout_pad) * 2 <= _G_RESIDENT_BYTES

    x_pad = jnp.pad(x, ((0, n_pad - n), (0, 0)))              # feature dim kept unpadded
    dinv2d = dinv_pad.reshape(n_pad, 1).astype(jnp.float32)

    w0 = jnp.pad(params["w0"], ((0, 0), (0, hid_pad - hidden))).astype(jnp.bfloat16)
    b0 = jnp.pad(params["b0"], (0, hid_pad - hidden)).reshape(1, hid_pad).astype(jnp.float32)
    w1 = jnp.pad(params["w1"], ((0, hid_pad - hidden), (0, fout_pad - fout))).astype(jnp.bfloat16)
    b1 = jnp.pad(params["b1"], (0, fout_pad - fout)).reshape(1, fout_pad).astype(jnp.float32)

    # Layer 1 (fused with layer 2's X@W):
    #   g0 = D^{-1/2}(X W0);  g1 = D^{-1/2} relu(D^{-1/2}(A+I)g0 + b0) W1
    g0 = _scaled_xw(x_pad, w0, dinv2d, tile_m=tm)
    g1 = _agg_layer(ai_pad, g0, dinv2d, b0, w1, tile_m=tm, tile_k=tk,
                    g_resident=g_resident, out_dtype=jnp.bfloat16, fused_w1=True)
    # Layer 2:  y = relu(D^{-1/2}(A+I)g1 + b1)
    y = _agg_layer(ai_pad, g1, dinv2d, b1, None, tile_m=tm, tile_k=tk,
                   g_resident=g_resident, out_dtype=jnp.float32, fused_w1=False)
    return y[:n, :fout]


def encoder_reference(params, x, ai, dinv):
    """Plain-JAX mirror of the kernel math (exact int A, bf16 MXU operands, f32 acc)."""
    a_bf = ai.astype(jnp.bfloat16)
    d = dinv[:, None].astype(jnp.float32)

    def mm(lhs_bf, w):
        return jnp.dot(lhs_bf, w.astype(jnp.bfloat16), preferred_element_type=jnp.float32)

    g0 = (d * mm(x.astype(jnp.bfloat16), params["w0"])).astype(jnp.bfloat16)
    h = jnp.maximum(d * jnp.dot(a_bf, g0, preferred_element_type=jnp.float32)
                    + params["b0"], 0.0)
    g1 = (d * mm(h.astype(jnp.bfloat16), params["w1"])).astype(jnp.bfloat16)
    y = jnp.maximum(d * jnp.dot(a_bf, g1, preferred_element_type=jnp.float32)
                    + params["b1"], 0.0)
    return y


# ------------------------------- Driver ------------------------------------- #
if __name__ == "__main__":
    N = 200            # nodes (exercises node-dim padding)
    E = 800            # directed edges (symmetrized in glue)
    IN_CH = 32
    OUT_CH = 16        # hidden = 32; hidden/out padded to 128 lanes in-kernel

    key = jax.random.PRNGKey(0)
    kx, ke, kp = jax.random.split(key, 3)

    x = jax.random.normal(kx, (N, IN_CH), jnp.float32)
    edge_index = jax.random.randint(ke, (2, E), 0, N, dtype=jnp.int32)

    params = init_encoder_params(kp, IN_CH, OUT_CH)
    ai_pad, dinv_pad = prepare_graph(edge_index, N)      # hoisted, reused across calls

    out = encoder_forward(params, x, ai_pad, dinv_pad)
    out = jax.block_until_ready(out)

    # Also exercise the streamed-XW path with multiple k blocks.
    out_stream = encoder_forward(params, x, ai_pad, dinv_pad,
                                 tile_m=128, tile_k=128, g_resident=False)
    out_stream = jax.block_until_ready(out_stream)

    ref = encoder_reference(params, x, ai_pad[:N, :N], dinv_pad[:N])
    assert out.shape == (N, OUT_CH)
    assert jnp.allclose(out, ref, atol=2e-2, rtol=2e-2), float(
        jnp.max(jnp.abs(out - ref)))
    assert jnp.allclose(out_stream, ref, atol=2e-2, rtol=2e-2), float(
        jnp.max(jnp.abs(out_stream - ref)))

    print("KERNEL_OK")
</pallas_src>

<mosaic_0001>
module attributes {stable_mosaic.version = 11 : i64} {
  func.func @kernel(%arg0: i32, %arg1: i32, %arg2: memref<128x256xi8, #tpu.memory_space<vmem>>, %arg3: memref<256x128xbf16, #tpu.memory_space<vmem>>, %arg4: memref<128x1xf32, #tpu.memory_space<vmem>>, %arg5: memref<1x128xf32, #tpu.memory_space<vmem>>, %arg6: memref<128x128xbf16, #tpu.memory_space<vmem>>, %arg7: memref<128x128xbf16, #tpu.memory_space<vmem>>, %arg8: memref<128x128xf32, #tpu.memory_space<vmem>>) attributes {dimension_semantics = [#tpu.dimension_semantics<parallel>, #tpu.dimension_semantics<arbitrary>], iteration_bounds = array<i64: 2, 1>, scalar_prefetch = 0 : i64, scratch_operands = 1 : i64, tpu.core_type = #tpu.core_type<tc>, window_params = [{transform_indices = @transform_0, window_bounds = array<i64: 128, 256>}, {pipeline_mode = #tpu.pipeline_mode<synchronous>, transform_indices = @transform_1, window_bounds = array<i64: 256, 128>}, {transform_indices = @transform_2, window_bounds = array<i64: 128, 1>}, {pipeline_mode = #tpu.pipeline_mode<synchronous>, transform_indices = @transform_3, window_bounds = array<i64: 1, 128>}, {pipeline_mode = #tpu.pipeline_mode<synchronous>, transform_indices = @transform_4, window_bounds = array<i64: 128, 128>}, {transform_indices = @transform_5, window_bounds = array<i64: 128, 128>}]} {
    %c0_i32 = arith.constant 0 : i32
    %0 = arith.cmpi eq, %arg1, %c0_i32 : i32
    %1 = arith.extui %0 : i1 to i32
    %c0_i32_0 = arith.constant 0 : i32
    %2 = arith.cmpi ne, %1, %c0_i32_0 : i32
    scf.if %2 {
      %cst_9 = arith.constant 0.000000e+00 : f32
      %16 = vector.broadcast %cst_9 : f32 to vector<128x128xf32>
      %c0_10 = arith.constant 0 : index
      %c0_11 = arith.constant 0 : index
      %17 = vector.load %arg8[%c0_10, %c0_11] : memref<128x128xf32, #tpu.memory_space<vmem>>, vector<128x128xf32>
      tpu.vector_store %arg8[%c0_10, %c0_11], %16 {strides = array<i32>} : memref<128x128xf32, #tpu.memory_space<vmem>>, vector<128x128xf32>,
    } else {
    }
    %c256_i32 = arith.constant 256 : i32
    %3 = arith.muli %arg1, %c256_i32 : i32
    %4 = tpu.assume_multiple %3, 256 : i32
    %5 = arith.index_cast %4 : i32 to index
    %c0 = arith.constant 0 : index
    %6 = vector.load %arg3[%5, %c0] : memref<256x128xbf16, #tpu.memory_space<vmem>>, vector<256x128xbf16>
    %c0_1 = arith.constant 0 : index
    %c0_2 = arith.constant 0 : index
    %7 = vector.load %arg8[%c0_1, %c0_2] : memref<128x128xf32, #tpu.memory_space<vmem>>, vector<128x128xf32>
    %c0_3 = arith.constant 0 : index
    %c0_4 = arith.constant 0 : index
    %8 = vector.load %arg2[%c0_3, %c0_4] : memref<128x256xi8, #tpu.memory_space<vmem>>, vector<128x256xi8>
    %9 = arith.sitofp %8 : vector<128x256xi8> to vector<128x256xbf16>
    %cst = arith.constant dense<0.000000e+00> : vector<128x128xf32>
    %10 = tpu.matmul %9, %6, %cst {dimension_numbers = #tpu.dot_dimension_numbers<[1], [0], [0], [1], [0, 0, 1, 1], [], []>} : vector<128x256xbf16>, vector<256x128xbf16>, vector<128x128xf32> -> vector<128x128xf32>
    %11 = arith.addf %7, %10 : vector<128x128xf32>
    %c0_5 = arith.constant 0 : index
    %c0_6 = arith.constant 0 : index
    %12 = vector.load %arg8[%c0_5, %c0_6] : memref<128x128xf32, #tpu.memory_space<vmem>>, vector<128x128xf32>
    tpu.vector_store %arg8[%c0_5, %c0_6], %11 {strides = array<i32>} : memref<128x128xf32, #tpu.memory_space<vmem>>, vector<128x128xf32>,
    %c0_i32_7 = arith.constant 0 : i32
    %13 = arith.cmpi eq, %arg1, %c0_i32_7 : i32
    %14 = arith.extui %13 : i1 to i32
    %c0_i32_8 = arith.constant 0 : i32
    %15 = arith.cmpi ne, %14, %c0_i32_8 : i32
    scf.if %15 {
      %c0_9 = arith.constant 0 : index
      %c0_10 = arith.constant 0 : index
      %16 = vector.load %arg4[%c0_9, %c0_10] : memref<128x1xf32, #tpu.memory_space<vmem>>, vector<128x1xf32>
      %c0_11 = arith.constant 0 : index
      %c0_12 = arith.constant 0 : index
      %17 = vector.load %arg8[%c0_11, %c0_12] : memref<128x128xf32, #tpu.memory_space<vmem>>, vector<128x128xf32>
      %18 = vector.broadcast %16 : vector<128x1xf32> to vector<128x128xf32>
      %19 = arith.mulf %18, %17 : vector<128x128xf32>
      %c0_13 = arith.constant 0 : index
      %c0_14 = arith.constant 0 : index
      %20 = vector.load %arg5[%c0_13, %c0_14] : memref<1x128xf32, #tpu.memory_space<vmem>>, vector<1x128xf32>
      %21 = vector.broadcast %20 : vector<1x128xf32> to vector<128x128xf32>
      %22 = arith.addf %19, %21 : vector<128x128xf32>
      %cst_15 = arith.constant 0.000000e+00 : f32
      %23 = vector.broadcast %cst_15 : f32 to vector<128x128xf32>
      %24 = arith.maximumf %22, %23 : vector<128x128xf32>
      %25 = arith.truncf %24 : vector<128x128xf32> to vector<128x128xbf16>
      %c0_16 = arith.constant 0 : index
      %c0_17 = arith.constant 0 : index
      %26 = vector.load %arg6[%c0_16, %c0_17] : memref<128x128xbf16, #tpu.memory_space<vmem>>, vector<128x128xbf16>
      %cst_18 = arith.constant dense<0.000000e+00> : vector<128x128xf32>
      %27 = tpu.matmul %25, %26, %cst_18 {dimension_numbers = #tpu.dot_dimension_numbers<[1], [0], [0], [1], [0, 0, 1, 1], [], []>} : vector<128x128xbf16>, vector<128x128xbf16>, vector<128x128xf32> -> vector<128x128xf32>
      %28 = vector.broadcast %16 : vector<128x1xf32> to vector<128x128xf32>
      %29 = arith.mulf %28, %27 : vector<128x128xf32>
      %30 = arith.truncf %29 : vector<128x128xf32> to vector<128x128xbf16>
      %c0_19 = arith.constant 0 : index
      %c0_20 = arith.constant 0 : index
      %31 = vector.load %arg7[%c0_19, %c0_20] : memref<128x128xbf16, #tpu.memory_space<vmem>>, vector<128x128xbf16>
      tpu.vector_store %arg7[%c0_19, %c0_20], %30 {strides = array<i32>} : memref<128x128xbf16, #tpu.memory_space<vmem>>, vector<128x128xbf16>,
    } else {
    }
    return
  }
  func.func @transform_0(%arg0: i32, %arg1: i32) -> (i32, i32) {
    %c0_i32 = arith.constant 0 : i32
    return %arg0, %arg1 : i32, i32
  }
  func.func @transform_1(%arg0: i32, %arg1: i32) -> (i32, i32) {
    %c0_i32 = arith.constant 0 : i32
    %c0_i32_0 = arith.constant 0 : i32
    %c0_i32_1 = arith.constant 0 : i32
    return %c0_i32, %c0_i32_0 : i32, i32
  }
  func.func @transform_2(%arg0: i32, %arg1: i32) -> (i32, i32) {
    %c0_i32 = arith.constant 0 : i32
    %c0_i32_0 = arith.constant 0 : i32
    return %arg0, %c0_i32 : i32, i32
  }
  func.func @transform_3(%arg0: i32, %arg1: i32) -> (i32, i32) {
    %c0_i32 = arith.constant 0 : i32
    %c0_i32_0 = arith.constant 0 : i32
    %c0_i32_1 = arith.constant 0 : i32
    return %c0_i32, %c0_i32_0 : i32, i32
  }
  func.func @transform_4(%arg0: i32, %arg1: i32) -> (i32, i32) {
    %c0_i32 = arith.constant 0 : i32
    %c0_i32_0 = arith.constant 0 : i32
    %c0_i32_1 = arith.constant 0 : i32
    return %c0_i32, %c0_i32_0 : i32, i32
  }
  func.func @transform_5(%arg0: i32, %arg1: i32) -> (i32, i32) {
    %c0_i32 = arith.constant 0 : i32
    %c0_i32_0 = arith.constant 0 : i32
    return %arg0, %c0_i32 : i32, i32
  }
}

module attributes {stable_mosaic.version = 11 : i64} {
  func.func @_xw_kernel(%arg0: i32, %arg1: memref<128x32xf32, #tpu.memory_space<vmem>>, %arg2: memref<32x128xbf16, #tpu.memory_space<vmem>>, %arg3: memref<128x1xf32, #tpu.memory_space<vmem>>, %arg4: memref<128x128xbf16, #tpu.memory_space<vmem>>) attributes {dimension_semantics = [#tpu.dimension_semantics<parallel>], iteration_bounds = array<i64: 2>, scalar_prefetch = 0 : i64, scratch_operands = 0 : i64, tpu.core_type = #tpu.core_type<tc>, window_params = [{transform_indices = @transform_0, window_bounds = array<i64: 128, 32>}, {pipeline_mode = #tpu.pipeline_mode<synchronous>, transform_indices = @transform_1, window_bounds = array<i64: 32, 128>}, {transform_indices = @transform_2, window_bounds = array<i64: 128, 1>}, {transform_indices = @transform_3, window_bounds = array<i64: 128, 128>}]} {
    %c0 = arith.constant 0 : index
    %c0_0 = arith.constant 0 : index
    %0 = vector.load %arg1[%c0, %c0_0] : memref<128x32xf32, #tpu.memory_space<vmem>>, vector<128x32xf32>
    %1 = arith.truncf %0 : vector<128x32xf32> to vector<128x32xbf16>
    %c0_1 = arith.constant 0 : index
    %c0_2 = arith.constant 0 : index
    %2 = vector.load %arg2[%c0_1, %c0_2] : memref<32x128xbf16, #tpu.memory_space<vmem>>, vector<32x128xbf16>
    %cst = arith.constant dense<0.000000e+00> : vector<128x128xf32>
    %3 = tpu.matmul %1, %2, %cst {dimension_numbers = #tpu.dot_dimension_numbers<[1], [0], [0], [1], [0, 0, 1, 1], [], []>} : vector<128x32xbf16>, vector<32x128xbf16>, vector<128x128xf32> -> vector<128x128xf32>
    %c0_3 = arith.constant 0 : index
    %c0_4 = arith.constant 0 : index
    %4 = vector.load %arg3[%c0_3, %c0_4] : memref<128x1xf32, #tpu.memory_space<vmem>>, vector<128x1xf32>
    %5 = vector.broadcast %4 : vector<128x1xf32> to vector<128x128xf32>
    %6 = arith.mulf %5, %3 : vector<128x128xf32>
    %7 = arith.truncf %6 : vector<128x128xf32> to vector<128x128xbf16>
    %c0_5 = arith.constant 0 : index
    %c0_6 = arith.constant 0 : index
    %8 = vector.load %arg4[%c0_5, %c0_6] : memref<128x128xbf16, #tpu.memory_space<vmem>>, vector<128x128xbf16>
    tpu.vector_store %arg4[%c0_5, %c0_6], %7 {strides = array<i32>} : memref<128x128xbf16, #tpu.memory_space<vmem>>, vector<128x128xbf16>,
    return
  }
  func.func @transform_0(%arg0: i32) -> (i32, i32) {
    %c0_i32 = arith.constant 0 : i32
    %c0_i32_0 = arith.constant 0 : i32
    return %arg0, %c0_i32 : i32, i32
  }
  func.func @transform_1(%arg0: i32) -> (i32, i32) {
    %c0_i32 = arith.constant 0 : i32
    %c0_i32_0 = arith.constant 0 : i32
    %c0_i32_1 = arith.constant 0 : i32
    return %c0_i32, %c0_i32_0 : i32, i32
  }
  func.func @transform_2(%arg0: i32) -> (i32, i32) {
    %c0_i32 = arith.constant 0 : i32
    %c0_i32_0 = arith.constant 0 : i32
    return %arg0, %c0_i32 : i32, i32
  }
  func.func @transform_3(%arg0: i32) -> (i32, i32) {
    %c0_i32 = arith.constant 0 : i32
    %c0_i32_0 = arith.constant 0 : i32
    return %arg0, %c0_i32 : i32, i32
  }
}

module attributes {stable_mosaic.version = 11 : i64} {
  func.func @kernel(%arg0: i32, %arg1: i32, %arg2: memref<128x256xi8, #tpu.memory_space<vmem>>, %arg3: memref<256x128xbf16, #tpu.memory_space<vmem>>, %arg4: memref<128x1xf32, #tpu.memory_space<vmem>>, %arg5: memref<1x128xf32, #tpu.memory_space<vmem>>, %arg6: memref<128x128xf32, #tpu.memory_space<vmem>>) attributes {dimension_semantics = [#tpu.dimension_semantics<parallel>, #tpu.dimension_semantics<arbitrary>], iteration_bounds = array<i64: 2, 1>, scalar_prefetch = 0 : i64, scratch_operands = 0 : i64, tpu.core_type = #tpu.core_type<tc>, window_params = [{transform_indices = @transform_0, window_bounds = array<i64: 128, 256>}, {pipeline_mode = #tpu.pipeline_mode<synchronous>, transform_indices = @transform_1, window_bounds = array<i64: 256, 128>}, {transform_indices = @transform_2, window_bounds = array<i64: 128, 1>}, {pipeline_mode = #tpu.pipeline_mode<synchronous>, transform_indices = @transform_3, window_bounds = array<i64: 1, 128>}, {transform_indices = @transform_4, window_bounds = array<i64: 128, 128>}]} {
    %c0_i32 = arith.constant 0 : i32
    %0 = arith.cmpi eq, %arg1, %c0_i32 : i32
    %1 = arith.extui %0 : i1 to i32
    %c0_i32_0 = arith.constant 0 : i32
    %2 = arith.cmpi ne, %1, %c0_i32_0 : i32
    scf.if %2 {
      %cst_9 = arith.constant 0.000000e+00 : f32
      %16 = vector.broadcast %cst_9 : f32 to vector<128x128xf32>
      %c0_10 = arith.constant 0 : index
      %c0_11 = arith.constant 0 : index
      %17 = vector.load %arg6[%c0_10, %c0_11] : memref<128x128xf32, #tpu.memory_space<vmem>>, vector<128x128xf32>
      tpu.vector_store %arg6[%c0_10, %c0_11], %16 {strides = array<i32>} : memref<128x128xf32, #tpu.memory_space<vmem>>, vector<128x128xf32>,
    } else {
    }
    %c256_i32 = arith.constant 256 : i32
    %3 = arith.muli %arg1, %c256_i32 : i32
    %4 = tpu.assume_multiple %3, 256 : i32
    %5 = arith.index_cast %4 : i32 to index
    %c0 = arith.constant 0 : index
    %6 = vector.load %arg3[%5, %c0] : memref<256x128xbf16, #tpu.memory_space<vmem>>, vector<256x128xbf16>
    %c0_1 = arith.constant 0 : index
    %c0_2 = arith.constant 0 : index
    %7 = vector.load %arg6[%c0_1, %c0_2] : memref<128x128xf32, #tpu.memory_space<vmem>>, vector<128x128xf32>
    %c0_3 = arith.constant 0 : index
    %c0_4 = arith.constant 0 : index
    %8 = vector.load %arg2[%c0_3, %c0_4] : memref<128x256xi8, #tpu.memory_space<vmem>>, vector<128x256xi8>
    %9 = arith.sitofp %8 : vector<128x256xi8> to vector<128x256xbf16>
    %cst = arith.constant dense<0.000000e+00> : vector<128x128xf32>
    %10 = tpu.matmul %9, %6, %cst {dimension_numbers = #tpu.dot_dimension_numbers<[1], [0], [0], [1], [0, 0, 1, 1], [], []>} : vector<128x256xbf16>, vector<256x128xbf16>, vector<128x128xf32> -> vector<128x128xf32>
    %11 = arith.addf %7, %10 : vector<128x128xf32>
    %c0_5 = arith.constant 0 : index
    %c0_6 = arith.constant 0 : index
    %12 = vector.load %arg6[%c0_5, %c0_6] : memref<128x128xf32, #tpu.memory_space<vmem>>, vector<128x128xf32>
    tpu.vector_store %arg6[%c0_5, %c0_6], %11 {strides = array<i32>} : memref<128x128xf32, #tpu.memory_space<vmem>>, vector<128x128xf32>,
    %c0_i32_7 = arith.constant 0 : i32
    %13 = arith.cmpi eq, %arg1, %c0_i32_7 : i32
    %14 = arith.extui %13 : i1 to i32
    %c0_i32_8 = arith.constant 0 : i32
    %15 = arith.cmpi ne, %14, %c0_i32_8 : i32
    scf.if %15 {
      %c0_9 = arith.constant 0 : index
      %c0_10 = arith.constant 0 : index
      %16 = vector.load %arg4[%c0_9, %c0_10] : memref<128x1xf32, #tpu.memory_space<vmem>>, vector<128x1xf32>
      %c0_11 = arith.constant 0 : index
      %c0_12 = arith.constant 0 : index
      %17 = vector.load %arg6[%c0_11, %c0_12] : memref<128x128xf32, #tpu.memory_space<vmem>>, vector<128x128xf32>
      %18 = vector.broadcast %16 : vector<128x1xf32> to vector<128x128xf32>
      %19 = arith.mulf %18, %17 : vector<128x128xf32>
      %c0_13 = arith.constant 0 : index
      %c0_14 = arith.constant 0 : index
      %20 = vector.load %arg5[%c0_13, %c0_14] : memref<1x128xf32, #tpu.memory_space<vmem>>, vector<1x128xf32>
      %21 = vector.broadcast %20 : vector<1x128xf32> to vector<128x128xf32>
      %22 = arith.addf %19, %21 : vector<128x128xf32>
      %cst_15 = arith.constant 0.000000e+00 : f32
      %23 = vector.broadcast %cst_15 : f32 to vector<128x128xf32>
      %24 = arith.maximumf %22, %23 : vector<128x128xf32>
      %c0_16 = arith.constant 0 : index
      %c0_17 = arith.constant 0 : index
      %25 = vector.load %arg6[%c0_16, %c0_17] : memref<128x128xf32, #tpu.memory_space<vmem>>, vector<128x128xf32>
      tpu.vector_store %arg6[%c0_16, %c0_17], %24 {strides = array<i32>} : memref<128x128xf32, #tpu.memory_space<vmem>>, vector<128x128xf32>,
    } else {
    }
    return
  }
  func.func @transform_0(%arg0: i32, %arg1: i32) -> (i32, i32) {
    %c0_i32 = arith.constant 0 : i32
    return %arg0, %arg1 : i32, i32
  }
  func.func @transform_1(%arg0: i32, %arg1: i32) -> (i32, i32) {
    %c0_i32 = arith.constant 0 : i32
    %c0_i32_0 = arith.constant 0 : i32
    %c0_i32_1 = arith.constant 0 : i32
    return %c0_i32, %c0_i32_0 : i32, i32
  }
  func.func @transform_2(%arg0: i32, %arg1: i32) -> (i32, i32) {
    %c0_i32 = arith.constant 0 : i32
    %c0_i32_0 = arith.constant 0 : i32
    return %arg0, %c0_i32 : i32, i32
  }
  func.func @transform_3(%arg0: i32, %arg1: i32) -> (i32, i32) {
    %c0_i32 = arith.constant 0 : i32
    %c0_i32_0 = arith.constant 0 : i32
    %c0_i32_1 = arith.constant 0 : i32
    return %c0_i32, %c0_i32_0 : i32, i32
  }
  func.func @transform_4(%arg0: i32, %arg1: i32) -> (i32, i32) {
    %c0_i32 = arith.constant 0 : i32
    %c0_i32_0 = arith.constant 0 : i32
    return %arg0, %c0_i32 : i32, i32
  }
}

</mosaic_0001>

<llo_original>
// kernel: encoder_forward.3
$region0: #{encoder_forward.3}
  #allocation0 [shape = 'u32[]', space=smem, size = 0x4, offset = 0x4, fixed_abs, tag = 'smem constant byte address 0x4 - core index']
  #allocation1 [shape = 'u32[144,128]{1,0:T(1,128)}', space=vmem, size = 0x12000, scoped, tag = 'internal scratch']
  %s0 = inlined_call_operand.vmem [shape: f32[256,32], index: 0, kind: input, shape index: {}]
  %s1 = inlined_call_operand.vmem [shape: bf16[32,128], index: 1, kind: input, shape index: {}]
  %s2 = inlined_call_operand.vmem [shape: f32[256,1], index: 2, kind: input, shape index: {}]
  %s3 = inlined_call_operand.vmem [shape: bf16[256,128], index: 3, kind: output, shape index: {}]
  %s4 = sld [smem:[#allocation0]]
  $region45: #{encoder_forward.3} parent=0
    _
  %s6 = ssub.s32 1, %s4
  %s7 = scalar_select 0, %s6, %s4
  loop: start=0, step=1, limit=4
  $region2: #{encoder_forward.3} parent=0 // loop_pre_header
    _
  $region3: #{encoder_forward.3} parent=0 // loop_header
    %s9 = sphi 0, %s13
    %p10 = scmp.ge.s32.totalorder %s9, 4
    %s19 = sphi 0, %s21
    %s22 = sphi 0, %s19
    %s23 = sphi 0, %s22
    %s39 = sphi 0, %s23
    %s43 = sphi 0, %s43
    %s45 = sphi 0, %s43
    %s46 = sphi 0, %s45
    %s60 = sphi 0, %s46
    %s66 = sphi 0, %s68
    %s69 = sphi 0, %s66
    %s70 = sphi 0, %s69
    %s86 = sphi 0, %s70
    %s92 = sphi 0, %s94
    %s95 = sphi 0, %s92
    %s96 = sphi 0, %s95
    %s112 = sphi 0, %s96
  $region4: #{encoder_forward.3} parent=0 // loop_header_branch
    %12 = sbr.rel (%p10) target = $region8
  $region5: #{encoder_forward.3} parent=0 // loop_body
    %s14 = ssub.s32 %s9, 1
    %s15 = ssub.s32 %s9, 2
    %s16 = sadd.s32 %s9, 1
    %s17 = ssub.s32 %s9, %s16
    %p18 = scmp.eq.s32.totalorder %s17, 0
    %s20 = sadd.s32 %s19, 1
    %s21 = scalar_select %p18, %s19, %s20
    %p24 = pneg %p18
    %p25 = scmp.eq.s32.totalorder %s9, 1
    %p26 = por %p24, %p25
    %p27 = scmp.ne.s32.totalorder %s19, %s22
    %p28 = scmp.eq.s32.totalorder %s9, 0
    %p29 = por %p27, %p28
    %p30 = scmp.ne.s32.totalorder %s19, %s22
    %p31 = scmp.eq.s32.totalorder %s14, 1
    %p32 = por %p30, %p31
    %p33 = scmp.ne.s32.totalorder %s22, %s23
    %p34 = scmp.eq.s32.totalorder %s14, 0
    %p35 = por %p33, %p34
    %p36 = scmp.ne.s32.totalorder %s22, %s23
    %p37 = scmp.eq.s32.totalorder %s15, 1
    %p38 = por %p36, %p37
    %p40 = scmp.ne.s32.totalorder %s23, %s39
    %p41 = scmp.eq.s32.totalorder %s15, 0
    %p42 = por %p40, %p41
    %s44 = sadd.s32 %s43, 1
    %p47 = scmp.eq.s32.totalorder %s9, 1
    %p48 = scmp.ne.s32.totalorder %s43, %s45
    %p49 = scmp.eq.s32.totalorder %s9, 0
    %p50 = por %p48, %p49
    %p51 = scmp.ne.s32.totalorder %s43, %s45
    %p52 = scmp.eq.s32.totalorder %s14, 1
    %p53 = por %p51, %p52
    %p54 = scmp.ne.s32.totalorder %s45, %s46
    %p55 = scmp.eq.s32.totalorder %s14, 0
    %p56 = por %p54, %p55
    %p57 = scmp.ne.s32.totalorder %s45, %s46
    %p58 = scmp.eq.s32.totalorder %s15, 1
    %p59 = por %p57, %p58
    %p61 = scmp.ne.s32.totalorder %s46, %s60
    %p62 = scmp.eq.s32.totalorder %s15, 0
    %p63 = por %p61, %p62
    %s64 = ssub.s32 %s9, %s16
    %p65 = scmp.eq.s32.totalorder %s64, 0
    %s67 = sadd.s32 %s66, 1
    %s68 = scalar_select %p65, %s66, %s67
    %p71 = pneg %p65
    %p72 = scmp.eq.s32.totalorder %s9, 1
    %p73 = por %p71, %p72
    %p74 = scmp.ne.s32.totalorder %s66, %s69
    %p75 = scmp.eq.s32.totalorder %s9, 0
    %p76 = por %p74, %p75
    %p77 = scmp.ne.s32.totalorder %s66, %s69
    %p78 = scmp.eq.s32.totalorder %s14, 1
    %p79 = por %p77, %p78
    %p80 = scmp.ne.s32.totalorder %s69, %s70
    %p81 = scmp.eq.s32.totalorder %s14, 0
    %p82 = por %p80, %p81
    %p83 = scmp.ne.s32.totalorder %s69, %s70
    %p84 = scmp.eq.s32.totalorder %s15, 1
    %p85 = por %p83, %p84
    %p87 = scmp.ne.s32.totalorder %s70, %s86
    %p88 = scmp.eq.s32.totalorder %s15, 0
    %p89 = por %p87, %p88
    %s90 = ssub.s32 %s9, %s16
    %p91 = scmp.eq.s32.totalorder %s90, 0
    %s93 = sadd.s32 %s92, 1
    %s94 = scalar_select %p91, %s92, %s93
    %p97 = pneg %p91
    %p98 = scmp.eq.s32.totalorder %s9, 1
    %p99 = por %p97, %p98
    %p100 = scmp.ne.s32.totalorder %s92, %s95
    %p101 = scmp.eq.s32.totalorder %s9, 0
    %p102 = por %p100, %p101
    %p103 = scmp.ne.s32.totalorder %s92, %s95
    %p104 = scmp.eq.s32.totalorder %s14, 1
    %p105 = por %p103, %p104
    %p106 = scmp.ne.s32.totalorder %s95, %s96
    %p107 = scmp.eq.s32.totalorder %s14, 0
    %p108 = por %p106, %p107
    %p109 = scmp.ne.s32.totalorder %s95, %s96
    %p110 = scmp.eq.s32.totalorder %s15, 1
    %p111 = por %p109, %p110
    %p113 = scmp.ne.s32.totalorder %s96, %s112
    %p114 = scmp.eq.s32.totalorder %s15, 0
    %p115 = por %p113, %p114
    %p116 = scmp.le.s32.totalorder 1, %s9
    %p117 = scmp.lt.s32.totalorder %s9, 3
    %p118 = pnand %p116, %p117
    %p119 = pneg %p118
    // Predicated region
    $region9: #{encoder_forward.3} parent=5 // pred_check
      _
    $region10: #{encoder_forward.3} parent=5 // pred_check_branch
      %121 = sbr.rel (%p118) target = $region12
    $region11: #{encoder_forward.3} parent=5 // pred_region
      %s122 = ssub.s32 %s9, 1
      // Predicated region
      $region13: #{encoder_forward.3} parent=11 // pred_check
        %p123 = pneg %p56
      $region14: #{encoder_forward.3} parent=11 // pred_check_branch
        %125 = sbr.rel (%p123) target = $region16
      $region15: #{encoder_forward.3} parent=11 // pred_region
        _
      $region16: #{encoder_forward.3} parent=11 // pred_fallthru
        _
    $region12: #{encoder_forward.3} parent=5 // pred_fallthru
      _
    %p126 = scmp.lt.s32.totalorder %s9, 2
    // Predicated region
    $region17: #{encoder_forward.3} parent=5 // pred_check
      %p127 = pneg %p126
    $region18: #{encoder_forward.3} parent=5 // pred_check_branch
      %129 = sbr.rel (%p127) target = $region20
    $region19: #{encoder_forward.3} parent=5 // pred_region
      // Predicated region
      $region21: #{encoder_forward.3} parent=19 // pred_check
        %p130 = pneg %p29
      $region22: #{encoder_forward.3} parent=19 // pred_check_branch
        %132 = sbr.rel (%p130) target = $region24
      $region23: #{encoder_forward.3} parent=19 // pred_region
        %s133 = smul.u32 16, %s9
        %p134 = scmp.lt.s32.totalorder %s133, 31
        %s135 = scalar_select %p134, %s133, 31
        %s136 = smul.addr %s135, 8
        %s137 = scalar_lea.vmem %s0, %s136
        %s138 = smul.u32 16, %s9
      $region24: #{encoder_forward.3} parent=19 // pred_fallthru
        _
      // Predicated region
      $region25: #{encoder_forward.3} parent=19 // pred_check
        %p139 = pneg %p76
      $region26: #{encoder_forward.3} parent=19 // pred_check_branch
        %141 = sbr.rel (%p139) target = $region28
      $region27: #{encoder_forward.3} parent=19 // pred_region
        %s142 = smul.u32 16, %s9
        %p143 = scmp.lt.s32.totalorder %s142, 31
        %s144 = scalar_select %p143, %s142, 31
        %s145 = smul.addr %s144, 8
        %s146 = scalar_lea.vmem %s2, %s145
        %s147 = smul.u32 16, %s9
      $region28: #{encoder_forward.3} parent=19 // pred_fallthru
        _
    $region20: #{encoder_forward.3} parent=5 // pred_fallthru
      _
    %p148 = scmp.le.s32.totalorder 1, %s9
    %p149 = scmp.lt.s32.totalorder %s9, 3
    %p150 = pnand %p148, %p149
    %p151 = pneg %p150
    // Predicated region
    $region29: #{encoder_forward.3} parent=5 // pred_check
      _
    $region30: #{encoder_forward.3} parent=5 // pred_check_branch
      %153 = sbr.rel (%p150) target = $region32
    $region31: #{encoder_forward.3} parent=5 // pred_region
      %s154 = ssub.s32 %s9, 1
      %s155 = smul.u32 16, %s14
      %p156 = scmp.lt.s32.totalorder %s155, 31
      %s157 = scalar_select %p156, %s155, 31
      %s158 = smul.addr %s157, 8
      %s159 = scalar_lea.vmem %s0, %s158
      %p160 = pneg %p35
      %p161 = pneg %p32
      %p162 = pneg %p56
      %p163 = pneg %p53
      %s164 = smul.u32 16, %s14
      %p165 = scmp.lt.s32.totalorder %s164, 31
      %s166 = scalar_select %p165, %s164, 31
      %s167 = smul.addr %s166, 8
      %s168 = scalar_lea.vmem %s2, %s167
      %p169 = pneg %p82
      %p170 = pneg %p79
      %p171 = pneg %p108
      %p172 = pneg %p105
      %s173 = smul.u32 16, %s14
      %p174 = scmp.lt.s32.totalorder %s173, 31
      %s175 = scalar_select %p174, %s173, 31
      %s176 = smul.addr %s175, 4
      %s177 = scalar_lea.vmem %s3, %s176
      %s178 = smul.u32 16, %s14
      %p179 = scmp.lt.s32.totalorder %s178, 31
      %s180 = scalar_select %p179, %s178, 31
      %s181 = smul.addr %s180, 8
      %s182 = scalar_lea.vmem %s0, %s181
      %s183 = smul.u32 16, %s14
      %s184 = smul.u32 16, %s14
      %p185 = scmp.lt.s32.totalorder %s184, 31
      %s186 = scalar_select %p185, %s184, 31
      %s187 = smul.addr %s186, 8
      %s188 = scalar_lea.vmem %s2, %s187
      %s189 = smul.u32 16, %s14
      %s190 = smul.u32 16, %s14
      %p191 = scmp.lt.s32.totalorder %s190, 31
      %s192 = scalar_select %p191, %s190, 31
      %s193 = smul.addr %s192, 4
      %s194 = scalar_lea.vmem %s3, %s193
      %s195 = smul.u32 16, %s14
      %v197 = vld [vmem:[%s182] sm:$0xff]
      %v198 = vld [vmem:[%s182 + $0x8] sm:$0xff]
      %v199 = vld [vmem:[%s182 + $0x10] sm:$0xff]
      %v200 = vld [vmem:[%s182 + $0x18] sm:$0xff]
      %v201 = vld [vmem:[%s182 + $0x20] sm:$0xff]
      %v202 = vld [vmem:[%s182 + $0x28] sm:$0xff]
      %v203 = vld [vmem:[%s182 + $0x30] sm:$0xff]
      %v204 = vld [vmem:[%s182 + $0x38] sm:$0xff]
      %v205 = vld [vmem:[%s182 + $0x40] sm:$0xff]
      %v206 = vld [vmem:[%s182 + $0x48] sm:$0xff]
      %v207 = vld [vmem:[%s182 + $0x50] sm:$0xff]
      %v208 = vld [vmem:[%s182 + $0x58] sm:$0xff]
      %v209 = vld [vmem:[%s182 + $0x60] sm:$0xff]
      %v210 = vld [vmem:[%s182 + $0x68] sm:$0xff]
      %v211 = vld [vmem:[%s182 + $0x70] sm:$0xff]
      %v212 = vld [vmem:[%s182 + $0x78] sm:$0xff]
      %v213 = vpack.c.bf16 %v198, %v197
      %v214 = vpack.c.bf16 %v200, %v199
      %v215 = vpack.c.bf16 %v202, %v201
      %v216 = vpack.c.bf16 %v204, %v203
      %v217 = vpack.c.bf16 %v206, %v205
      %v218 = vpack.c.bf16 %v208, %v207
      %v219 = vpack.c.bf16 %v210, %v209
      %v220 = vpack.c.bf16 %v212, %v211
      %v221 = vld [vmem:[%s1] sm:$0xf]
      %v222 = vld [vmem:[%s1 + $0x4] sm:$0xf]
      %v223 = vld [vmem:[%s1 + $0x8] sm:$0xf]
      %v224 = vld [vmem:[%s1 + $0xc] sm:$0xf]
      %v229 = vunpack.c.l.b16 %v221
      %v230 = vunpack.c.l.b16 %v222
      %v231 = vunpack.c.l.b16 %v223
      %v232 = vunpack.c.l.b16 %v224
      %v233 = vpack.c.b16 %v230, %v229
      %v234 = vpack.c.b16 %v232, %v231
      %vm237 = vcmask 261120
      %v239 = vsel %vm237, %v213, 0
      %v242 = vsel %vm237, %v214, 0
      %v245 = vsel %vm237, %v215, 0
      %v248 = vsel %vm237, %v216, 0
      %v251 = vsel %vm237, %v217, 0
      %v254 = vsel %vm237, %v218, 0
      %v257 = vsel %vm237, %v219, 0
      %v260 = vsel %vm237, %v220, 0
      %262 = vmatprep.subr.bf16.mxu0 0
      %263 = vmatpush1.bf16.msra.mxu0 %v233
      %264 = vmatprep.subr.bf16.mxu0 0
      %265 = vmatpush1.bf16.msra.mxu0 %v234
      %266 = vmatprep.subr.bf16.mxu0 0
      %267 = vmatpush1.bf16.msra.mxu0 0
      %268 = vmatprep.subr.bf16.mxu0 0
      %269 = vmatpush1.bf16.msra.mxu0 0
      %270 = vmatprep.subr.bf16.mxu0 0
      %271 = vmatpush1.bf16.msra.mxu0 0
      %272 = vmatprep.subr.bf16.mxu0 0
      %273 = vmatpush1.bf16.msra.mxu0 0
      %274 = vmatprep.subr.bf16.mxu0 0
      %275 = vmatpush1.bf16.msra.mxu0 0
      %276 = vmatprep.subr.bf16.mxu0 0
      %277 = vmatpush1.bf16.msra.mxu0 0
      %278 = vmatprep.subr.bf16.mxu0 0
      %279 = vmatpush1.bf16.msra.mxu0 0
      %280 = vmatprep.subr.bf16.mxu0 0
      %281 = vmatpush1.bf16.msra.mxu0 0
      %282 = vmatprep.subr.bf16.mxu0 0
      %283 = vmatpush1.bf16.msra.mxu0 0
      %284 = vmatprep.subr.bf16.mxu0 0
      %285 = vmatpush1.bf16.msra.mxu0 0
      %286 = vmatprep.subr.bf16.mxu0 0
      %287 = vmatpush1.bf16.msra.mxu0 0
      %288 = vmatprep.subr.bf16.mxu0 0
      %289 = vmatpush1.bf16.msra.mxu0 0
      %290 = vmatprep.subr.bf16.mxu0 0
      %291 = vmatpush1.bf16.msra.mxu0 0
      %292 = vmatprep.subr.bf16.mxu0 0
      %293 = vmatpush1.bf16.msra.mxu0 0
      %294 = vmatprep.mubr.bf16.mxu0 0
      %295 = vmatmul.mubr.bf16.gmra.mrb[0].mxu0 %v239
      %v296 = vpop.f32.mrb[0].mxu0
      %v297 = vadd.f32 0.0, %v296
      %v298 = vpop.f32.mrb[0].mxu0
      %v299 = vpop.f32.mrb[0].mxu0
      %v300 = vadd.f32 0.0, %v299
      %v301 = vpop.f32.mrb[0].mxu0
      %302 = vmatprep.mubr.bf16.mxu0 0
      %303 = vmatmul.mubr.bf16.gmra.mrb[0].mxu0 %v242
      %v304 = vpop.f32.mrb[0].mxu0
      %v305 = vadd.f32 0.0, %v304
      %v306 = vpop.f32.mrb[0].mxu0
      %v307 = vpop.f32.mrb[0].mxu0
      %v308 = vadd.f32 0.0, %v307
      %v309 = vpop.f32.mrb[0].mxu0
      %310 = vmatprep.mubr.bf16.mxu0 0
      %311 = vmatmul.mubr.bf16.gmra.mrb[0].mxu0 %v245
      %v312 = vpop.f32.mrb[0].mxu0
      %v313 = vadd.f32 0.0, %v312
      %v314 = vpop.f32.mrb[0].mxu0
      %v315 = vpop.f32.mrb[0].mxu0
      %v316 = vadd.f32 0.0, %v315
      %v317 = vpop.f32.mrb[0].mxu0
      %318 = vmatprep.mubr.bf16.mxu0 0
      %319 = vmatmul.mubr.bf16.gmra.mrb[0].mxu0 %v248
      %v320 = vpop.f32.mrb[0].mxu0
      %v321 = vadd.f32 0.0, %v320
      %v322 = vpop.f32.mrb[0].mxu0
      %v323 = vpop.f32.mrb[0].mxu0
      %v324 = vadd.f32 0.0, %v323
      %v325 = vpop.f32.mrb[0].mxu0
      %326 = vmatprep.mubr.bf16.mxu0 0
      %327 = vmatmul.mubr.bf16.gmra.mrb[0].mxu0 %v251
      %v328 = vpop.f32.mrb[0].mxu0
      %v329 = vadd.f32 0.0, %v328
      %v330 = vpop.f32.mrb[0].mxu0
      %v331 = vpop.f32.mrb[0].mxu0
      %v332 = vadd.f32 0.0, %v331
      %v333 = vpop.f32.mrb[0].mxu0
      %334 = vmatprep.mubr.bf16.mxu0 0
      %335 = vmatmul.mubr.bf16.gmra.mrb[0].mxu0 %v254
      %v336 = vpop.f32.mrb[0].mxu0
      %v337 = vadd.f32 0.0, %v336
      %v338 = vpop.f32.mrb[0].mxu0
      %v339 = vpop.f32.mrb[0].mxu0
      %v340 = vadd.f32 0.0, %v339
      %v341 = vpop.f32.mrb[0].mxu0
      %342 = vmatprep.mubr.bf16.mxu0 0
      %343 = vmatmul.mubr.bf16.gmra.mrb[0].mxu0 %v257
      %v344 = vpop.f32.mrb[0].mxu0
      %v345 = vadd.f32 0.0, %v344
      %v346 = vpop.f32.mrb[0].mxu0
      %v347 = vpop.f32.mrb[0].mxu0
      %v348 = vadd.f32 0.0, %v347
      %v349 = vpop.f32.mrb[0].mxu0
      %350 = vmatprep.mubr.bf16.mxu0 0
      %351 = vmatmul.mubr.bf16.gmra.mrb[0].mxu0 %v260
      %v352 = vpop.f32.mrb[0].mxu0
      %v353 = vadd.f32 0.0, %v352
      %v354 = vpop.f32.mrb[0].mxu0
      %v355 = vpop.f32.mrb[0].mxu0
      %v356 = vadd.f32 0.0, %v355
      %v357 = vpop.f32.mrb[0].mxu0
      %358 = vdwg.mxu0
      %v359 = vld [vmem:[%s188] sm:$0xff]
      %v360 = vld [vmem:[%s188 + $0x8] sm:$0xff]
      %v361 = vld [vmem:[%s188 + $0x10] sm:$0xff]
      %v362 = vld [vmem:[%s188 + $0x18] sm:$0xff]
      %v363 = vld [vmem:[%s188 + $0x20] sm:$0xff]
      %v364 = vld [vmem:[%s188 + $0x28] sm:$0xff]
      %v365 = vld [vmem:[%s188 + $0x30] sm:$0xff]
      %v366 = vld [vmem:[%s188 + $0x38] sm:$0xff]
      %v367 = vld [vmem:[%s188 + $0x40] sm:$0xff]
      %v368 = vld [vmem:[%s188 + $0x48] sm:$0xff]
      %v369 = vld [vmem:[%s188 + $0x50] sm:$0xff]
      %v370 = vld [vmem:[%s188 + $0x58] sm:$0xff]
      %v371 = vld [vmem:[%s188 + $0x60] sm:$0xff]
      %v372 = vld [vmem:[%s188 + $0x68] sm:$0xff]
      %v373 = vld [vmem:[%s188 + $0x70] sm:$0xff]
      %v374 = vld [vmem:[%s188 + $0x78] sm:$0xff]
      %376 = vset.pattern.permute.xlu0 0
      %377 = vperm.xlu0 %376, %v359
      %v378 = vpop.permute.xlu0 %377
      %381 = vset.pattern.permute.xlu0 0
      %382 = vperm.xlu0 %381, %v360
      %v383 = vpop.permute.xlu0 %382
      %386 = vset.pattern.permute.xlu0 0
      %387 = vperm.xlu0 %386, %v361
      %v388 = vpop.permute.xlu0 %387
      %391 = vset.pattern.permute.xlu0 0
      %392 = vperm.xlu0 %391, %v362
      %v393 = vpop.permute.xlu0 %392
      %396 = vset.pattern.permute.xlu0 0
      %397 = vperm.xlu0 %396, %v363
      %v398 = vpop.permute.xlu0 %397
      %401 = vset.pattern.permute.xlu0 0
      %402 = vperm.xlu0 %401, %v364
      %v403 = vpop.permute.xlu0 %402
      %406 = vset.pattern.permute.xlu0 0
      %407 = vperm.xlu0 %406, %v365
      %v408 = vpop.permute.xlu0 %407
      %411 = vset.pattern.permute.xlu0 0
      %412 = vperm.xlu0 %411, %v366
      %v413 = vpop.permute.xlu0 %412
      %416 = vset.pattern.permute.xlu0 0
      %417 = vperm.xlu0 %416, %v367
      %v418 = vpop.permute.xlu0 %417
      %421 = vset.pattern.permute.xlu0 0
      %422 = vperm.xlu0 %421, %v368
      %v423 = vpop.permute.xlu0 %422
      %426 = vset.pattern.permute.xlu0 0
      %427 = vperm.xlu0 %426, %v369
      %v428 = vpop.permute.xlu0 %427
      %431 = vset.pattern.permute.xlu0 0
      %432 = vperm.xlu0 %431, %v370
      %v433 = vpop.permute.xlu0 %432
      %436 = vset.pattern.permute.xlu0 0
      %437 = vperm.xlu0 %436, %v371
      %v438 = vpop.permute.xlu0 %437
      %441 = vset.pattern.permute.xlu0 0
      %442 = vperm.xlu0 %441, %v372
      %v443 = vpop.permute.xlu0 %442
      %446 = vset.pattern.permute.xlu0 0
      %447 = vperm.xlu0 %446, %v373
      %v448 = vpop.permute.xlu0 %447
      %451 = vset.pattern.permute.xlu0 0
      %452 = vperm.xlu0 %451, %v374
      %v453 = vpop.permute.xlu0 %452
      %v455 = vmul.f32 %v378, %v297
      %v456 = vmul.f32 %v383, %v300
      %v457 = vmul.f32 %v388, %v305
      %v458 = vmul.f32 %v393, %v308
      %v459 = vmul.f32 %v398, %v313
      %v460 = vmul.f32 %v403, %v316
      %v461 = vmul.f32 %v408, %v321
      %v462 = vmul.f32 %v413, %v324
      %v463 = vmul.f32 %v418, %v329
      %v464 = vmul.f32 %v423, %v332
      %v465 = vmul.f32 %v428, %v337
      %v466 = vmul.f32 %v433, %v340
      %v467 = vmul.f32 %v438, %v345
      %v468 = vmul.f32 %v443, %v348
      %v469 = vmul.f32 %v448, %v353
      %v470 = vmul.f32 %v453, %v356
      %v471 = vpack.c.bf16 %v456, %v455
      %v472 = vpack.c.bf16 %v458, %v457
      %v473 = vpack.c.bf16 %v460, %v459
      %v474 = vpack.c.bf16 %v462, %v461
      %v475 = vpack.c.bf16 %v464, %v463
      %v476 = vpack.c.bf16 %v466, %v465
      %v477 = vpack.c.bf16 %v468, %v467
      %v478 = vpack.c.bf16 %v470, %v469
      %v487 = vunpack.c.l.b16 %v471
      %v488 = vunpack.c.h.b16 %v471
      %v489 = vunpack.c.l.b16 %v472
      %v490 = vunpack.c.h.b16 %v472
      %v491 = vunpack.c.l.b16 %v473
      %v492 = vunpack.c.h.b16 %v473
      %v493 = vunpack.c.l.b16 %v474
      %v494 = vunpack.c.h.b16 %v474
      %v495 = vunpack.c.l.b16 %v475
      %v496 = vunpack.c.h.b16 %v475
      %v497 = vunpack.c.l.b16 %v476
      %v498 = vunpack.c.h.b16 %v476
      %v499 = vunpack.c.l.b16 %v477
      %v500 = vunpack.c.h.b16 %v477
      %v501 = vunpack.c.l.b16 %v478
      %v502 = vunpack.c.h.b16 %v478
      %v503 = vpack.c.b16 %v487, %v487
      %v504 = vpack.c.b16 %v488, %v488
      %v505 = vpack.c.b16 %v489, %v489
      %v506 = vpack.c.b16 %v490, %v490
      %v507 = vpack.c.b16 %v491, %v491
      %v508 = vpack.c.b16 %v492, %v492
      %v509 = vpack.c.b16 %v493, %v493
      %v510 = vpack.c.b16 %v494, %v494
      %v511 = vpack.c.b16 %v495, %v495
      %v512 = vpack.c.b16 %v496, %v496
      %v513 = vpack.c.b16 %v497, %v497
      %v514 = vpack.c.b16 %v498, %v498
      %v515 = vpack.c.b16 %v499, %v499
      %v516 = vpack.c.b16 %v500, %v500
      %v517 = vpack.c.b16 %v501, %v501
      %v518 = vpack.c.b16 %v502, %v502
      %535 = vst [vmem:[%s194] sm:$0xf] %v503
      %536 = vst [vmem:[%s194 + $0x4] sm:$0xf] %v504
      %537 = vst [vmem:[%s194 + $0x8] sm:$0xf] %v505
      %538 = vst [vmem:[%s194 + $0xc] sm:$0xf] %v506
      %539 = vst [vmem:[%s194 + $0x10] sm:$0xf] %v507
      %540 = vst [vmem:[%s194 + $0x14] sm:$0xf] %v508
      %541 = vst [vmem:[%s194 + $0x18] sm:$0xf] %v509
      %542 = vst [vmem:[%s194 + $0x1c] sm:$0xf] %v510
      %543 = vst [vmem:[%s194 + $0x20] sm:$0xf] %v511
      %544 = vst [vmem:[%s194 + $0x24] sm:$0xf] %v512
      %545 = vst [vmem:[%s194 + $0x28] sm:$0xf] %v513
      %546 = vst [vmem:[%s194 + $0x2c] sm:$0xf] %v514
      %547 = vst [vmem:[%s194 + $0x30] sm:$0xf] %v515
      %548 = vst [vmem:[%s194 + $0x34] sm:$0xf] %v516
      %549 = vst [vmem:[%s194 + $0x38] sm:$0xf] %v517
      %550 = vst [vmem:[%s194 + $0x3c] sm:$0xf] %v518
      %s551 = smul.u32 16, %s14
      %p552 = scmp.lt.s32.totalorder %s551, 31
      %s553 = scalar_select %p552, %s551, 31
      %s554 = smul.addr %s553, 4
      %s555 = scalar_lea.vmem %s3, %s554
      // Predicated region
      $region33: #{encoder_forward.3} parent=31 // pred_check
        %p556 = pneg %p105
      $region34: #{encoder_forward.3} parent=31 // pred_check_branch
        %558 = sbr.rel (%p556) target = $region36
      $region35: #{encoder_forward.3} parent=31 // pred_region
        %s559 = smul.u32 16, %s14
      $region36: #{encoder_forward.3} parent=31 // pred_fallthru
        _
    $region32: #{encoder_forward.3} parent=5 // pred_fallthru
      _
    %p560 = scmp.le.s32.totalorder 2, %s9
    // Predicated region
    $region37: #{encoder_forward.3} parent=5 // pred_check
      %p561 = pneg %p560
    $region38: #{encoder_forward.3} parent=5 // pred_check_branch
      %563 = sbr.rel (%p561) target = $region40
    $region39: #{encoder_forward.3} parent=5 // pred_region
      %s564 = ssub.s32 %s9, 2
      // Predicated region
      $region41: #{encoder_forward.3} parent=39 // pred_check
        %p565 = pneg %p111
      $region42: #{encoder_forward.3} parent=39 // pred_check_branch
        %567 = sbr.rel (%p565) target = $region44
      $region43: #{encoder_forward.3} parent=39 // pred_region
        %s568 = smul.u32 16, %s15
        %p569 = scmp.lt.s32.totalorder %s568, 31
        %s570 = scalar_select %p569, %s568, 31
        %s571 = smul.addr %s570, 4
        %s572 = scalar_lea.vmem %s3, %s571
      $region44: #{encoder_forward.3} parent=39 // pred_fallthru
        _
    $region40: #{encoder_forward.3} parent=5 // pred_fallthru
      _
  $region6: #{encoder_forward.3} parent=0 // loop_footer
    %s13 = sadd.s32 1, %s9
  $region7: #{encoder_forward.3} parent=0 // loop_footer_branch
    %8 = sbr.rel target = $region3
  $region8: #{encoder_forward.3} parent=0 // loop_exit
    _

// kernel: encoder_forward.4
$region0: #{encoder_forward.4}
  #allocation0 [shape = 'u32[]', space=smem, size = 0x4, offset = 0x4, fixed_abs, tag = 'smem constant byte address 0x4 - core index']
  #allocation1 [shape = 'u32[144,128]{1,0:T(1,128)}', space=vmem, size = 0x12000, scoped, tag = 'internal scratch']
  #allocation2 [shape = 'f32[128,128]{1,0:T(8,128)}', space=vmem, size = 0x10000, scoped, tag = 'scratch operand']
  %s0 = inlined_call_operand.vmem [shape: s8[256,256], index: 0, kind: input, shape index: {}]
  %s1 = inlined_call_operand.vmem [shape: bf16[256,128], index: 1, kind: input, shape index: {}]
  %s2 = inlined_call_operand.vmem [shape: f32[256,1], index: 2, kind: input, shape index: {}]
  %s3 = inlined_call_operand.vmem [shape: f32[1,128], index: 3, kind: input, shape index: {}]
  %s4 = inlined_call_operand.vmem [shape: bf16[128,128], index: 4, kind: input, shape index: {}]
  %s5 = inlined_call_operand.vmem [shape: bf16[256,128], index: 5, kind: output, shape index: {}]
  %s6 = sld [smem:[#allocation0]]
  $region61: #{encoder_forward.4} parent=0
    _
  %s8 = ssub.s32 1, %s6
  %s9 = scalar_select 0, %s8, %s6
  loop: start=0, step=1, limit=4
  $region2: #{encoder_forward.4} parent=0 // loop_pre_header
    _
  $region3: #{encoder_forward.4} parent=0 // loop_header
    %s11 = sphi 0, %s15
    %p12 = scmp.ge.s32.totalorder %s11, 4
    %s18 = sphi 0, %s30
    %s19 = sphi 0, %s26
    %s20 = sphi 0, %s18
    %s21 = sphi 0, %s19
    %s22 = sphi 0, %s20
    %s23 = sphi 0, %s21
    %s35 = sphi 0, %s37
    %s38 = sphi 0, %s35
    %s39 = sphi 0, %s38
    %s55 = sphi 0, %s39
    %s59 = sphi 0, %s59
    %s61 = sphi 0, %s59
    %s62 = sphi 0, %s61
    %s76 = sphi 0, %s62
    %s82 = sphi 0, %s84
    %s85 = sphi 0, %s82
    %s86 = sphi 0, %s85
    %s102 = sphi 0, %s86
    %s106 = sphi 0, %s106
    %s108 = sphi 0, %s106
    %s109 = sphi 0, %s108
    %s123 = sphi 0, %s109
    %s127 = sphi 0, %s127
    %s129 = sphi 0, %s127
    %s130 = sphi 0, %s129
    %s144 = sphi 0, %s130
    %s150 = sphi 0, %s152
    %s153 = sphi 0, %s150
    %s154 = sphi 0, %s153
    %s170 = sphi 0, %s154
  $region4: #{encoder_forward.4} parent=0 // loop_header_branch
    %14 = sbr.rel (%p12) target = $region8
  $region5: #{encoder_forward.4} parent=0 // loop_body
    %s16 = ssub.s32 %s11, 1
    %s17 = ssub.s32 %s11, 2
    %s24 = sadd.s32 1, %s19
    %p25 = scmp.ge.s32.totalorder %s24, 1
    %s26 = scalar_select %p25, 0, %s24
    %s27 = sadd.s32 1, %s18
    %s28 = scalar_select %p25, %s27, %s18
    %p29 = scmp.ge.s32.totalorder %s28, 2
    %s30 = scalar_select %p29, 0, %s28
    %s31 = ssub.s32 %s18, %s30
    %s32 = ssub.s32 %s19, %s26
    %s33 = sor.u32 %s31, %s32
    %p34 = scmp.eq.s32.totalorder %s33, 0
    %s36 = sadd.s32 %s35, 1
    %s37 = scalar_select %p34, %s35, %s36
    %p40 = pneg %p34
    %p41 = scmp.eq.s32.totalorder %s11, 1
    %p42 = por %p40, %p41
    %p43 = scmp.ne.s32.totalorder %s35, %s38
    %p44 = scmp.eq.s32.totalorder %s11, 0
    %p45 = por %p43, %p44
    %p46 = scmp.ne.s32.totalorder %s35, %s38
    %p47 = scmp.eq.s32.totalorder %s16, 1
    %p48 = por %p46, %p47
    %p49 = scmp.ne.s32.totalorder %s38, %s39
    %p50 = scmp.eq.s32.totalorder %s16, 0
    %p51 = por %p49, %p50
    %p52 = scmp.ne.s32.totalorder %s38, %s39
    %p53 = scmp.eq.s32.totalorder %s17, 1
    %p54 = por %p52, %p53
    %p56 = scmp.ne.s32.totalorder %s39, %s55
    %p57 = scmp.eq.s32.totalorder %s17, 0
    %p58 = por %p56, %p57
    %s60 = sadd.s32 %s59, 1
    %p63 = scmp.eq.s32.totalorder %s11, 1
    %p64 = scmp.ne.s32.totalorder %s59, %s61
    %p65 = scmp.eq.s32.totalorder %s11, 0
    %p66 = por %p64, %p65
    %p67 = scmp.ne.s32.totalorder %s59, %s61
    %p68 = scmp.eq.s32.totalorder %s16, 1
    %p69 = por %p67, %p68
    %p70 = scmp.ne.s32.totalorder %s61, %s62
    %p71 = scmp.eq.s32.totalorder %s16, 0
    %p72 = por %p70, %p71
    %p73 = scmp.ne.s32.totalorder %s61, %s62
    %p74 = scmp.eq.s32.totalorder %s17, 1
    %p75 = por %p73, %p74
    %p77 = scmp.ne.s32.totalorder %s62, %s76
    %p78 = scmp.eq.s32.totalorder %s17, 0
    %p79 = por %p77, %p78
    %s80 = ssub.s32 %s18, %s30
    %p81 = scmp.eq.s32.totalorder %s80, 0
    %s83 = sadd.s32 %s82, 1
    %s84 = scalar_select %p81, %s82, %s83
    %p87 = pneg %p81
    %p88 = scmp.eq.s32.totalorder %s11, 1
    %p89 = por %p87, %p88
    %p90 = scmp.ne.s32.totalorder %s82, %s85
    %p91 = scmp.eq.s32.totalorder %s11, 0
    %p92 = por %p90, %p91
    %p93 = scmp.ne.s32.totalorder %s82, %s85
    %p94 = scmp.eq.s32.totalorder %s16, 1
    %p95 = por %p93, %p94
    %p96 = scmp.ne.s32.totalorder %s85, %s86
    %p97 = scmp.eq.s32.totalorder %s16, 0
    %p98 = por %p96, %p97
    %p99 = scmp.ne.s32.totalorder %s85, %s86
    %p100 = scmp.eq.s32.totalorder %s17, 1
    %p101 = por %p99, %p100
    %p103 = scmp.ne.s32.totalorder %s86, %s102
    %p104 = scmp.eq.s32.totalorder %s17, 0
    %p105 = por %p103, %p104
    %s107 = sadd.s32 %s106, 1
    %p110 = scmp.eq.s32.totalorder %s11, 1
    %p111 = scmp.ne.s32.totalorder %s106, %s108
    %p112 = scmp.eq.s32.totalorder %s11, 0
    %p113 = por %p111, %p112
    %p114 = scmp.ne.s32.totalorder %s106, %s108
    %p115 = scmp.eq.s32.totalorder %s16, 1
    %p116 = por %p114, %p115
    %p117 = scmp.ne.s32.totalorder %s108, %s109
    %p118 = scmp.eq.s32.totalorder %s16, 0
    %p119 = por %p117, %p118
    %p120 = scmp.ne.s32.totalorder %s108, %s109
    %p121 = scmp.eq.s32.totalorder %s17, 1
    %p122 = por %p120, %p121
    %p124 = scmp.ne.s32.totalorder %s109, %s123
    %p125 = scmp.eq.s32.totalorder %s17, 0
    %p126 = por %p124, %p125
    %s128 = sadd.s32 %s127, 1
    %p131 = scmp.eq.s32.totalorder %s11, 1
    %p132 = scmp.ne.s32.totalorder %s127, %s129
    %p133 = scmp.eq.s32.totalorder %s11, 0
    %p134 = por %p132, %p133
    %p135 = scmp.ne.s32.totalorder %s127, %s129
    %p136 = scmp.eq.s32.totalorder %s16, 1
    %p137 = por %p135, %p136
    %p138 = scmp.ne.s32.totalorder %s129, %s130
    %p139 = scmp.eq.s32.totalorder %s16, 0
    %p140 = por %p138, %p139
    %p141 = scmp.ne.s32.totalorder %s129, %s130
    %p142 = scmp.eq.s32.totalorder %s17, 1
    %p143 = por %p141, %p142
    %p145 = scmp.ne.s32.totalorder %s130, %s144
    %p146 = scmp.eq.s32.totalorder %s17, 0
    %p147 = por %p145, %p146
    %s148 = ssub.s32 %s18, %s30
    %p149 = scmp.eq.s32.totalorder %s148, 0
    %s151 = sadd.s32 %s150, 1
    %s152 = scalar_select %p149, %s150, %s151
    %p155 = pneg %p149
    %p156 = scmp.eq.s32.totalorder %s11, 1
    %p157 = por %p155, %p156
    %p158 = scmp.ne.s32.totalorder %s150, %s153
    %p159 = scmp.eq.s32.totalorder %s11, 0
    %p160 = por %p158, %p159
    %p161 = scmp.ne.s32.totalorder %s150, %s153
    %p162 = scmp.eq.s32.totalorder %s16, 1
    %p163 = por %p161, %p162
    %p164 = scmp.ne.s32.totalorder %s153, %s154
    %p165 = scmp.eq.s32.totalorder %s16, 0
    %p166 = por %p164, %p165
    %p167 = scmp.ne.s32.totalorder %s153, %s154
    %p168 = scmp.eq.s32.totalorder %s17, 1
    %p169 = por %p167, %p168
    %p171 = scmp.ne.s32.totalorder %s154, %s170
    %p172 = scmp.eq.s32.totalorder %s17, 0
    %p173 = por %p171, %p172
    %p174 = scmp.le.s32.totalorder 1, %s11
    %p175 = scmp.lt.s32.totalorder %s11, 3
    %p176 = pnand %p174, %p175
    %p177 = pneg %p176
    // Predicated region
    $region9: #{encoder_forward.4} parent=5 // pred_check
      _
    $region10: #{encoder_forward.4} parent=5 // pred_check_branch
      %179 = sbr.rel (%p176) target = $region12
    $region11: #{encoder_forward.4} parent=5 // pred_region
      %s180 = ssub.s32 %s11, 1
      // Predicated region
      $region13: #{encoder_forward.4} parent=11 // pred_check
        %p181 = pneg %p72
      $region14: #{encoder_forward.4} parent=11 // pred_check_branch
        %183 = sbr.rel (%p181) target = $region16
      $region15: #{encoder_forward.4} parent=11 // pred_region
        _
      $region16: #{encoder_forward.4} parent=11 // pred_fallthru
        _
      // Predicated region
      $region17: #{encoder_forward.4} parent=11 // pred_check
        %p184 = pneg %p119
      $region18: #{encoder_forward.4} parent=11 // pred_check_branch
        %186 = sbr.rel (%p184) target = $region20
      $region19: #{encoder_forward.4} parent=11 // pred_region
        _
      $region20: #{encoder_forward.4} parent=11 // pred_fallthru
        _
      // Predicated region
      $region21: #{encoder_forward.4} parent=11 // pred_check
        %p187 = pneg %p140
      $region22: #{encoder_forward.4} parent=11 // pred_check_branch
        %189 = sbr.rel (%p187) target = $region24
      $region23: #{encoder_forward.4} parent=11 // pred_region
        _
      $region24: #{encoder_forward.4} parent=11 // pred_fallthru
        _
    $region12: #{encoder_forward.4} parent=5 // pred_fallthru
      _
    %p190 = scmp.lt.s32.totalorder %s11, 2
    // Predicated region
    $region25: #{encoder_forward.4} parent=5 // pred_check
      %p191 = pneg %p190
    $region26: #{encoder_forward.4} parent=5 // pred_check_branch
      %193 = sbr.rel (%p191) target = $region28
    $region27: #{encoder_forward.4} parent=5 // pred_region
      // Predicated region
      $region29: #{encoder_forward.4} parent=27 // pred_check
        %p194 = pneg %p45
      $region30: #{encoder_forward.4} parent=27 // pred_check_branch
        %196 = sbr.rel (%p194) target = $region32
      $region31: #{encoder_forward.4} parent=27 // pred_region
        %s197 = smul.u32 4, %s18
        %s198 = smul.u32 2, %s19
        %p199 = scmp.lt.s32.totalorder %s197, 7
        %s200 = scalar_select %p199, %s197, 7
        %p201 = scmp.lt.s32.totalorder %s198, 1
        %s202 = scalar_select %p201, %s198, 1
        %s203 = smul.addr %s200, 2
        %s204 = sadd.s32 %s202, %s203
        %s205 = smul.addr %s204, 8
        %s206 = scalar_lea.vmem %s0, %s205
        %s207 = smul.u32 4, %s18
        %s208 = smul.u32 2, %s19
      $region32: #{encoder_forward.4} parent=27 // pred_fallthru
        _
      // Predicated region
      $region33: #{encoder_forward.4} parent=27 // pred_check
        %p209 = pneg %p92
      $region34: #{encoder_forward.4} parent=27 // pred_check_branch
        %211 = sbr.rel (%p209) target = $region36
      $region35: #{encoder_forward.4} parent=27 // pred_region
        %s212 = smul.u32 16, %s18
        %p213 = scmp.lt.s32.totalorder %s212, 31
        %s214 = scalar_select %p213, %s212, 31
        %s215 = smul.addr %s214, 8
        %s216 = scalar_lea.vmem %s2, %s215
        %s217 = smul.u32 16, %s18
      $region36: #{encoder_forward.4} parent=27 // pred_fallthru
        _
    $region28: #{encoder_forward.4} parent=5 // pred_fallthru
      _
    %p218 = scmp.le.s32.totalorder 1, %s11
    %p219 = scmp.lt.s32.totalorder %s11, 3
    %p220 = pnand %p218, %p219
    %p221 = pneg %p220
    // Predicated region
    $region37: #{encoder_forward.4} parent=5 // pred_check
      _
    $region38: #{encoder_forward.4} parent=5 // pred_check_branch
      %223 = sbr.rel (%p220) target = $region40
    $region39: #{encoder_forward.4} parent=5 // pred_region
      %s224 = ssub.s32 %s11, 1
      %s225 = smul.u32 4, %s20
      %s226 = smul.u32 2, %s21
      %p227 = scmp.lt.s32.totalorder %s225, 7
      %s228 = scalar_select %p227, %s225, 7
      %p229 = scmp.lt.s32.totalorder %s226, 1
      %s230 = scalar_select %p229, %s226, 1
      %s231 = smul.addr %s228, 2
      %s232 = sadd.s32 %s230, %s231
      %s233 = smul.addr %s232, 8
      %s234 = scalar_lea.vmem %s0, %s233
      %p235 = pneg %p51
      %p236 = pneg %p48
      %p237 = pneg %p72
      %p238 = pneg %p69
      %s239 = smul.u32 16, %s20
      %p240 = scmp.lt.s32.totalorder %s239, 31
      %s241 = scalar_select %p240, %s239, 31
      %s242 = smul.addr %s241, 8
      %s243 = scalar_lea.vmem %s2, %s242
      %p244 = pneg %p98
      %p245 = pneg %p95
      %p246 = pneg %p119
      %p247 = pneg %p116
      %p248 = pneg %p140
      %p249 = pneg %p137
      %p250 = pneg %p166
      %p251 = pneg %p163
      %s252 = smul.u32 16, %s20
      %p253 = scmp.lt.s32.totalorder %s252, 31
      %s254 = scalar_select %p253, %s252, 31
      %s255 = smul.addr %s254, 4
      %s256 = scalar_lea.vmem %s5, %s255
      %s257 = smul.u32 4, %s20
      %s258 = smul.u32 2, %s21
      %p259 = scmp.lt.s32.totalorder %s257, 7
      %s260 = scalar_select %p259, %s257, 7
      %p261 = scmp.lt.s32.totalorder %s258, 1
      %s262 = scalar_select %p261, %s258, 1
      %s263 = smul.addr %s260, 2
      %s264 = sadd.s32 %s262, %s263
      %s265 = smul.addr %s264, 8
      %s266 = scalar_lea.vmem %s0, %s265
      %s267 = smul.u32 4, %s20
      %s268 = smul.u32 2, %s21
      %s269 = smul.u32 16, %s20
      %p270 = scmp.lt.s32.totalorder %s269, 31
      %s271 = scalar_select %p270, %s269, 31
      %s272 = smul.addr %s271, 8
      %s273 = scalar_lea.vmem %s2, %s272
      %s274 = smul.u32 16, %s20
      %s275 = smul.u32 16, %s20
      %p276 = scmp.lt.s32.totalorder %s275, 31
      %s277 = scalar_select %p276, %s275, 31
      %s278 = smul.addr %s277, 4
      %s279 = scalar_lea.vmem %s5, %s278
      %s280 = smul.u32 16, %s20
      %p282 = scmp.eq.s32.totalorder %s21, 0
      // Predicated region
      $region41: #{encoder_forward.4} parent=39 // pred_check
        %p283 = pneg %p282
      $region42: #{encoder_forward.4} parent=39 // pred_check_branch
        %285 = sbr.rel (%p283) target = $region44
      $region43: #{encoder_forward.4} parent=39 // pred_region
        %286 = vst [vmem:[#allocation2] sm:$0xff] 0.0
        %287 = vst [vmem:[#allocation2 + $0x8] sm:$0xff] 0.0
        %288 = vst [vmem:[#allocation2 + $0x10] sm:$0xff] 0.0
        %289 = vst [vmem:[#allocation2 + $0x18] sm:$0xff] 0.0
        %290 = vst [vmem:[#allocation2 + $0x20] sm:$0xff] 0.0
        %291 = vst [vmem:[#allocation2 + $0x28] sm:$0xff] 0.0
        %292 = vst [vmem:[#allocation2 + $0x30] sm:$0xff] 0.0
        %293 = vst [vmem:[#allocation2 + $0x38] sm:$0xff] 0.0
        %294 = vst [vmem:[#allocation2 + $0x40] sm:$0xff] 0.0
        %295 = vst [vmem:[#allocation2 + $0x48] sm:$0xff] 0.0
        %296 = vst [vmem:[#allocation2 + $0x50] sm:$0xff] 0.0
        %297 = vst [vmem:[#allocation2 + $0x58] sm:$0xff] 0.0
        %298 = vst [vmem:[#allocation2 + $0x60] sm:$0xff] 0.0
        %299 = vst [vmem:[#allocation2 + $0x68] sm:$0xff] 0.0
        %300 = vst [vmem:[#allocation2 + $0x70] sm:$0xff] 0.0
        %301 = vst [vmem:[#allocation2 + $0x78] sm:$0xff] 0.0
      $region44: #{encoder_forward.4} parent=39 // pred_fallthru
        _
      %s302 = smul.u32 %s21, 256
      %s303 = sshra.s32 %s302, 3
      %s304 = sand.u32 %s302, 7
      %s305 = smul.addr %s303, 4
      %s306 = scalar_lea.vmem %s1, %s305
      %v307 = vld [vmem:[%s306] sm:$0xf]
      %v308 = vld [vmem:[%s306 + $0x4] sm:$0xf]
      %v309 = vld [vmem:[%s306 + $0x8] sm:$0xf]
      %v310 = vld [vmem:[%s306 + $0xc] sm:$0xf]
      %v311 = vld [vmem:[%s306 + $0x10] sm:$0xf]
      %v312 = vld [vmem:[%s306 + $0x14] sm:$0xf]
      %v313 = vld [vmem:[%s306 + $0x18] sm:$0xf]
      %v314 = vld [vmem:[%s306 + $0x1c] sm:$0xf]
      %v315 = vld [vmem:[%s306 + $0x20] sm:$0xf]
      %v316 = vld [vmem:[%s306 + $0x24] sm:$0xf]
      %v317 = vld [vmem:[%s306 + $0x28] sm:$0xf]
      %v318 = vld [vmem:[%s306 + $0x2c] sm:$0xf]
      %v319 = vld [vmem:[%s306 + $0x30] sm:$0xf]
      %v320 = vld [vmem:[%s306 + $0x34] sm:$0xf]
      %v321 = vld [vmem:[%s306 + $0x38] sm:$0xf]
      %v322 = vld [vmem:[%s306 + $0x3c] sm:$0xf]
      %v323 = vld [vmem:[%s306 + $0x40] sm:$0xf]
      %v324 = vld [vmem:[%s306 + $0x44] sm:$0xf]
      %v325 = vld [vmem:[%s306 + $0x48] sm:$0xf]
      %v326 = vld [vmem:[%s306 + $0x4c] sm:$0xf]
      %v327 = vld [vmem:[%s306 + $0x50] sm:$0xf]
      %v328 = vld [vmem:[%s306 + $0x54] sm:$0xf]
      %v329 = vld [vmem:[%s306 + $0x58] sm:$0xf]
      %v330 = vld [vmem:[%s306 + $0x5c] sm:$0xf]
      %v331 = vld [vmem:[%s306 + $0x60] sm:$0xf]
      %v332 = vld [vmem:[%s306 + $0x64] sm:$0xf]
      %v333 = vld [vmem:[%s306 + $0x68] sm:$0xf]
      %v334 = vld [vmem:[%s306 + $0x6c] sm:$0xf]
      %v335 = vld [vmem:[%s306 + $0x70] sm:$0xf]
      %v336 = vld [vmem:[%s306 + $0x74] sm:$0xf]
      %v337 = vld [vmem:[%s306 + $0x78] sm:$0xf]
      %v338 = vld [vmem:[%s306 + $0x7c] sm:$0xf]
      %v339 = vld [vmem:[#allocation2] sm:$0xff]
      %v340 = vld [vmem:[#allocation2 + $0x8] sm:$0xff]
      %v341 = vld [vmem:[#allocation2 + $0x10] sm:$0xff]
      %v342 = vld [vmem:[#allocation2 + $0x18] sm:$0xff]
      %v343 = vld [vmem:[#allocation2 + $0x20] sm:$0xff]
      %v344 = vld [vmem:[#allocation2 + $0x28] sm:$0xff]
      %v345 = vld [vmem:[#allocation2 + $0x30] sm:$0xff]
      %v346 = vld [vmem:[#allocation2 + $0x38] sm:$0xff]
      %v347 = vld [vmem:[#allocation2 + $0x40] sm:$0xff]
      %v348 = vld [vmem:[#allocation2 + $0x48] sm:$0xff]
      %v349 = vld [vmem:[#allocation2 + $0x50] sm:$0xff]
      %v350 = vld [vmem:[#allocation2 + $0x58] sm:$0xff]
      %v351 = vld [vmem:[#allocation2 + $0x60] sm:$0xff]
      %v352 = vld [vmem:[#allocation2 + $0x68] sm:$0xff]
      %v353 = vld [vmem:[#allocation2 + $0x70] sm:$0xff]
      %v354 = vld [vmem:[#allocation2 + $0x78] sm:$0xff]
      %v355 = vld [vmem:[%s266] sm:$0xff]
      %v356 = vld [vmem:[%s266 + $0x8] sm:$0xff]
      %v357 = vld [vmem:[%s266 + $0x10] sm:$0xff]
      %v358 = vld [vmem:[%s266 + $0x18] sm:$0xff]
      %v359 = vld [vmem:[%s266 + $0x20] sm:$0xff]
      %v360 = vld [vmem:[%s266 + $0x28] sm:$0xff]
      %v361 = vld [vmem:[%s266 + $0x30] sm:$0xff]
      %v362 = vld [vmem:[%s266 + $0x38] sm:$0xff]
      %v363 = vunpack.c.l.s8.bf16 %v355
      %v364 = vunpack.c.l.s8.bf16 %v356
      %v365 = vunpack.c.h.s8.bf16 %v355
      %v366 = vunpack.c.h.s8.bf16 %v356
      %v367 = vunpack.c.l.s8.bf16 %v357
      %v368 = vunpack.c.l.s8.bf16 %v358
      %v369 = vunpack.c.h.s8.bf16 %v357
      %v370 = vunpack.c.h.s8.bf16 %v358
      %v371 = vunpack.c.l.s8.bf16 %v359
      %v372 = vunpack.c.l.s8.bf16 %v360
      %v373 = vunpack.c.h.s8.bf16 %v359
      %v374 = vunpack.c.h.s8.bf16 %v360
      %v375 = vunpack.c.l.s8.bf16 %v361
      %v376 = vunpack.c.l.s8.bf16 %v362
      %v377 = vunpack.c.h.s8.bf16 %v361
      %v378 = vunpack.c.h.s8.bf16 %v362
      %v411 = vunpack.c.l.b16 %v307
      %v412 = vunpack.c.l.b16 %v308
      %v413 = vunpack.c.l.b16 %v309
      %v414 = vunpack.c.l.b16 %v310
      %v415 = vunpack.c.l.b16 %v311
      %v416 = vunpack.c.l.b16 %v312
      %v417 = vunpack.c.l.b16 %v313
      %v418 = vunpack.c.l.b16 %v314
      %v419 = vunpack.c.l.b16 %v315
      %v420 = vunpack.c.l.b16 %v316
      %v421 = vunpack.c.l.b16 %v317
      %v422 = vunpack.c.l.b16 %v318
      %v423 = vunpack.c.l.b16 %v319
      %v424 = vunpack.c.l.b16 %v320
      %v425 = vunpack.c.l.b16 %v321
      %v426 = vunpack.c.l.b16 %v322
      %v427 = vunpack.c.l.b16 %v323
      %v428 = vunpack.c.l.b16 %v324
      %v429 = vunpack.c.l.b16 %v325
      %v430 = vunpack.c.l.b16 %v326
      %v431 = vunpack.c.l.b16 %v327
      %v432 = vunpack.c.l.b16 %v328
      %v433 = vunpack.c.l.b16 %v329
      %v434 = vunpack.c.l.b16 %v330
      %v435 = vunpack.c.l.b16 %v331
      %v436 = vunpack.c.l.b16 %v332
      %v437 = vunpack.c.l.b16 %v333
      %v438 = vunpack.c.l.b16 %v334
      %v439 = vunpack.c.l.b16 %v335
      %v440 = vunpack.c.l.b16 %v336
      %v441 = vunpack.c.l.b16 %v337
      %v442 = vunpack.c.l.b16 %v338
      %v443 = vpack.c.b16 %v412, %v411
      %v444 = vpack.c.b16 %v414, %v413
      %v445 = vpack.c.b16 %v416, %v415
      %v446 = vpack.c.b16 %v418, %v417
      %v447 = vpack.c.b16 %v420, %v419
      %v448 = vpack.c.b16 %v422, %v421
      %v449 = vpack.c.b16 %v424, %v423
      %v450 = vpack.c.b16 %v426, %v425
      %v451 = vpack.c.b16 %v428, %v427
      %v452 = vpack.c.b16 %v430, %v429
      %v453 = vpack.c.b16 %v432, %v431
      %v454 = vpack.c.b16 %v434, %v433
      %v455 = vpack.c.b16 %v436, %v435
      %v456 = vpack.c.b16 %v438, %v437
      %v457 = vpack.c.b16 %v440, %v439
      %v458 = vpack.c.b16 %v442, %v441
      %475 = vmatprep.subr.bf16.mxu0 0
      %476 = vmatpush1.bf16.msra.mxu0 %v443
      %477 = vmatprep.subr.bf16.mxu0 0
      %478 = vmatpush1.bf16.msra.mxu0 %v444
      %479 = vmatprep.subr.bf16.mxu0 0
      %480 = vmatpush1.bf16.msra.mxu0 %v445
      %481 = vmatprep.subr.bf16.mxu0 0
      %482 = vmatpush1.bf16.msra.mxu0 %v446
      %483 = vmatprep.subr.bf16.mxu0 0
      %484 = vmatpush1.bf16.msra.mxu0 %v447
      %485 = vmatprep.subr.bf16.mxu0 0
      %486 = vmatpush1.bf16.msra.mxu0 %v448
      %487 = vmatprep.subr.bf16.mxu0 0
      %488 = vmatpush1.bf16.msra.mxu0 %v449
      %489 = vmatprep.subr.bf16.mxu0 0
      %490 = vmatpush1.bf16.msra.mxu0 %v450
      %491 = vmatprep.subr.bf16.mxu0 0
      %492 = vmatpush1.bf16.msra.mxu0 %v451
      %493 = vmatprep.subr.bf16.mxu0 0
      %494 = vmatpush1.bf16.msra.mxu0 %v452
      %495 = vmatprep.subr.bf16.mxu0 0
      %496 = vmatpush1.bf16.msra.mxu0 %v453
      %497 = vmatprep.subr.bf16.mxu0 0
      %498 = vmatpush1.bf16.msra.mxu0 %v454
      %499 = vmatprep.subr.bf16.mxu0 0
      %500 = vmatpush1.bf16.msra.mxu0 %v455
      %501 = vmatprep.subr.bf16.mxu0 0
      %502 = vmatpush1.bf16.msra.mxu0 %v456
      %503 = vmatprep.subr.bf16.mxu0 0
      %504 = vmatpush1.bf16.msra.mxu0 %v457
      %505 = vmatprep.subr.bf16.mxu0 0
      %506 = vmatpush1.bf16.msra.mxu0 %v458
      %507 = vmatprep.mubr.bf16.mxu0 %v364
      %508 = vmatmul.mubr.bf16.gmra.mrb[0].mxu0 %v363
      %v509 = vpop.f32.mrb[0].mxu0
      %v510 = vadd.f32 0.0, %v509
      %v511 = vpop.f32.mrb[0].mxu0
      %v512 = vpop.f32.mrb[0].mxu0
      %v513 = vadd.f32 0.0, %v512
      %v514 = vpop.f32.mrb[0].mxu0
      %515 = vmatprep.mubr.bf16.mxu0 %v366
      %516 = vmatmul.mubr.bf16.gmra.mrb[0].mxu0 %v365
      %v517 = vpop.f32.mrb[0].mxu0
      %v518 = vadd.f32 0.0, %v517
      %v519 = vpop.f32.mrb[0].mxu0
      %v520 = vpop.f32.mrb[0].mxu0
      %v521 = vadd.f32 0.0, %v520
      %v522 = vpop.f32.mrb[0].mxu0
      %523 = vmatprep.mubr.bf16.mxu0 %v368
      %524 = vmatmul.mubr.bf16.gmra.mrb[0].mxu0 %v367
      %v525 = vpop.f32.mrb[0].mxu0
      %v526 = vadd.f32 0.0, %v525
      %v527 = vpop.f32.mrb[0].mxu0
      %v528 = vpop.f32.mrb[0].mxu0
      %v529 = vadd.f32 0.0, %v528
      %v530 = vpop.f32.mrb[0].mxu0
      %531 = vmatprep.mubr.bf16.mxu0 %v370
      %532 = vmatmul.mubr.bf16.gmra.mrb[0].mxu0 %v369
      %v533 = vpop.f32.mrb[0].mxu0
      %v534 = vadd.f32 0.0, %v533
      %v535 = vpop.f32.mrb[0].mxu0
      %v536 = vpop.f32.mrb[0].mxu0
      %v537 = vadd.f32 0.0, %v536
      %v538 = vpop.f32.mrb[0].mxu0
      %539 = vmatprep.mubr.bf16.mxu0 %v372
      %540 = vmatmul.mubr.bf16.gmra.mrb[0].mxu0 %v371
      %v541 = vpop.f32.mrb[0].mxu0
      %v542 = vadd.f32 0.0, %v541
      %v543 = vpop.f32.mrb[0].mxu0
      %v544 = vpop.f32.mrb[0].mxu0
      %v545 = vadd.f32 0.0, %v544
      %v546 = vpop.f32.mrb[0].mxu0
      %547 = vmatprep.mubr.bf16.mxu0 %v374
      %548 = vmatmul.mubr.bf16.gmra.mrb[0].mxu0 %v373
      %v549 = vpop.f32.mrb[0].mxu0
      %v550 = vadd.f32 0.0, %v549
      %v551 = vpop.f32.mrb[0].mxu0
      %v552 = vpop.f32.mrb[0].mxu0
      %v553 = vadd.f32 0.0, %v552
      %v554 = vpop.f32.mrb[0].mxu0
      %555 = vmatprep.mubr.bf16.mxu0 %v376
      %556 = vmatmul.mubr.bf16.gmra.mrb[0].mxu0 %v375
      %v557 = vpop.f32.mrb[0].mxu0
      %v558 = vadd.f32 0.0, %v557
      %v559 = vpop.f32.mrb[0].mxu0
      %v560 = vpop.f32.mrb[0].mxu0
      %v561 = vadd.f32 0.0, %v560
      %v562 = vpop.f32.mrb[0].mxu0
      %563 = vmatprep.mubr.bf16.mxu0 %v378
      %564 = vmatmul.mubr.bf16.gmra.mrb[0].mxu0 %v377
      %v565 = vpop.f32.mrb[0].mxu0
      %v566 = vadd.f32 0.0, %v565
      %v567 = vpop.f32.mrb[0].mxu0
      %v568 = vpop.f32.mrb[0].mxu0
      %v569 = vadd.f32 0.0, %v568
      %v570 = vpop.f32.mrb[0].mxu0
      %571 = vdwg.mxu0
      %v572 = vadd.f32 %v339, %v510
      %v573 = vadd.f32 %v340, %v513
      %v574 = vadd.f32 %v341, %v518
      %v575 = vadd.f32 %v342, %v521
      %v576 = vadd.f32 %v343, %v526
      %v577 = vadd.f32 %v344, %v529
      %v578 = vadd.f32 %v345, %v534
      %v579 = vadd.f32 %v346, %v537
      %v580 = vadd.f32 %v347, %v542
      %v581 = vadd.f32 %v348, %v545
      %v582 = vadd.f32 %v349, %v550
      %v583 = vadd.f32 %v350, %v553
      %v584 = vadd.f32 %v351, %v558
      %v585 = vadd.f32 %v352, %v561
      %v586 = vadd.f32 %v353, %v566
      %v587 = vadd.f32 %v354, %v569
      %588 = vst [vmem:[#allocation2] sm:$0xff] %v572
      %589 = vst [vmem:[#allocation2 + $0x8] sm:$0xff] %v573
      %590 = vst [vmem:[#allocation2 + $0x10] sm:$0xff] %v574
      %591 = vst [vmem:[#allocation2 + $0x18] sm:$0xff] %v575
      %592 = vst [vmem:[#allocation2 + $0x20] sm:$0xff] %v576
      %593 = vst [vmem:[#allocation2 + $0x28] sm:$0xff] %v577
      %594 = vst [vmem:[#allocation2 + $0x30] sm:$0xff] %v578
      %595 = vst [vmem:[#allocation2 + $0x38] sm:$0xff] %v579
      %596 = vst [vmem:[#allocation2 + $0x40] sm:$0xff] %v580
      %597 = vst [vmem:[#allocation2 + $0x48] sm:$0xff] %v581
      %598 = vst [vmem:[#allocation2 + $0x50] sm:$0xff] %v582
      %599 = vst [vmem:[#allocation2 + $0x58] sm:$0xff] %v583
      %600 = vst [vmem:[#allocation2 + $0x60] sm:$0xff] %v584
      %601 = vst [vmem:[#allocation2 + $0x68] sm:$0xff] %v585
      %602 = vst [vmem:[#allocation2 + $0x70] sm:$0xff] %v586
      %603 = vst [vmem:[#allocation2 + $0x78] sm:$0xff] %v587
      // Predicated region
      $region45: #{encoder_forward.4} parent=39 // pred_check
        %p604 = pneg %p282
      $region46: #{encoder_forward.4} parent=39 // pred_check_branch
        %606 = sbr.rel (%p604) target = $region48
      $region47: #{encoder_forward.4} parent=39 // pred_region
        %v607 = vld [vmem:[%s273] sm:$0xff]
        %v608 = vld [vmem:[%s273 + $0x8] sm:$0xff]
        %v609 = vld [vmem:[%s273 + $0x10] sm:$0xff]
        %v610 = vld [vmem:[%s273 + $0x18] sm:$0xff]
        %v611 = vld [vmem:[%s273 + $0x20] sm:$0xff]
        %v612 = vld [vmem:[%s273 + $0x28] sm:$0xff]
        %v613 = vld [vmem:[%s273 + $0x30] sm:$0xff]
        %v614 = vld [vmem:[%s273 + $0x38] sm:$0xff]
        %v615 = vld [vmem:[%s273 + $0x40] sm:$0xff]
        %v616 = vld [vmem:[%s273 + $0x48] sm:$0xff]
        %v617 = vld [vmem:[%s273 + $0x50] sm:$0xff]
        %v618 = vld [vmem:[%s273 + $0x58] sm:$0xff]
        %v619 = vld [vmem:[%s273 + $0x60] sm:$0xff]
        %v620 = vld [vmem:[%s273 + $0x68] sm:$0xff]
        %v621 = vld [vmem:[%s273 + $0x70] sm:$0xff]
        %v622 = vld [vmem:[%s273 + $0x78] sm:$0xff]
        %v623 = vld [vmem:[#allocation2] sm:$0xff]
        %v624 = vld [vmem:[#allocation2 + $0x8] sm:$0xff]
        %v625 = vld [vmem:[#allocation2 + $0x10] sm:$0xff]
        %v626 = vld [vmem:[#allocation2 + $0x18] sm:$0xff]
        %v627 = vld [vmem:[#allocation2 + $0x20] sm:$0xff]
        %v628 = vld [vmem:[#allocation2 + $0x28] sm:$0xff]
        %v629 = vld [vmem:[#allocation2 + $0x30] sm:$0xff]
        %v630 = vld [vmem:[#allocation2 + $0x38] sm:$0xff]
        %v631 = vld [vmem:[#allocation2 + $0x40] sm:$0xff]
        %v632 = vld [vmem:[#allocation2 + $0x48] sm:$0xff]
        %v633 = vld [vmem:[#allocation2 + $0x50] sm:$0xff]
        %v634 = vld [vmem:[#allocation2 + $0x58] sm:$0xff]
        %v635 = vld [vmem:[#allocation2 + $0x60] sm:$0xff]
        %v636 = vld [vmem:[#allocation2 + $0x68] sm:$0xff]
        %v637 = vld [vmem:[#allocation2 + $0x70] sm:$0xff]
        %v638 = vld [vmem:[#allocation2 + $0x78] sm:$0xff]
        %640 = vset.pattern.permute.xlu0 0
        %641 = vperm.xlu0 %640, %v607
        %v642 = vpop.permute.xlu0 %641
        %645 = vset.pattern.permute.xlu0 0
        %646 = vperm.xlu0 %645, %v608
        %v647 = vpop.permute.xlu0 %646
        %650 = vset.pattern.permute.xlu0 0
        %651 = vperm.xlu0 %650, %v609
        %v652 = vpop.permute.xlu0 %651
        %655 = vset.pattern.permute.xlu0 0
        %656 = vperm.xlu0 %655, %v610
        %v657 = vpop.permute.xlu0 %656
        %660 = vset.pattern.permute.xlu0 0
        %661 = vperm.xlu0 %660, %v611
        %v662 = vpop.permute.xlu0 %661
        %665 = vset.pattern.permute.xlu0 0
        %666 = vperm.xlu0 %665, %v612
        %v667 = vpop.permute.xlu0 %666
        %670 = vset.pattern.permute.xlu0 0
        %671 = vperm.xlu0 %670, %v613
        %v672 = vpop.permute.xlu0 %671
        %675 = vset.pattern.permute.xlu0 0
        %676 = vperm.xlu0 %675, %v614
        %v677 = vpop.permute.xlu0 %676
        %680 = vset.pattern.permute.xlu0 0
        %681 = vperm.xlu0 %680, %v615
        %v682 = vpop.permute.xlu0 %681
        %685 = vset.pattern.permute.xlu0 0
        %686 = vperm.xlu0 %685, %v616
        %v687 = vpop.permute.xlu0 %686
        %690 = vset.pattern.permute.xlu0 0
        %691 = vperm.xlu0 %690, %v617
        %v692 = vpop.permute.xlu0 %691
        %695 = vset.pattern.permute.xlu0 0
        %696 = vperm.xlu0 %695, %v618
        %v697 = vpop.permute.xlu0 %696
        %700 = vset.pattern.permute.xlu0 0
        %701 = vperm.xlu0 %700, %v619
        %v702 = vpop.permute.xlu0 %701
        %705 = vset.pattern.permute.xlu0 0
        %706 = vperm.xlu0 %705, %v620
        %v707 = vpop.permute.xlu0 %706
        %710 = vset.pattern.permute.xlu0 0
        %711 = vperm.xlu0 %710, %v621
        %v712 = vpop.permute.xlu0 %711
        %715 = vset.pattern.permute.xlu0 0
        %716 = vperm.xlu0 %715, %v622
        %v717 = vpop.permute.xlu0 %716
        %v719 = vmul.f32 %v642, %v623
        %v720 = vmul.f32 %v647, %v624
        %v721 = vmul.f32 %v652, %v625
        %v722 = vmul.f32 %v657, %v626
        %v723 = vmul.f32 %v662, %v627
        %v724 = vmul.f32 %v667, %v628
        %v725 = vmul.f32 %v672, %v629
        %v726 = vmul.f32 %v677, %v630
        %v727 = vmul.f32 %v682, %v631
        %v728 = vmul.f32 %v687, %v632
        %v729 = vmul.f32 %v692, %v633
        %v730 = vmul.f32 %v697, %v634
        %v731 = vmul.f32 %v702, %v635
        %v732 = vmul.f32 %v707, %v636
        %v733 = vmul.f32 %v712, %v637
        %v734 = vmul.f32 %v717, %v638
        %v735 = vld [vmem:[%s3] sm:$0x1]
        %v737 = vlaneseq
        %v738 = vshrl.u32 %v737, 7
        %v739 = vsub.s32 0, %v738
        %v740 = vrot.slane %v735, %v739
        %v742 = vadd.f32 %v719, %v740
        %v743 = vadd.f32 %v720, %v740
        %v744 = vadd.f32 %v721, %v740
        %v745 = vadd.f32 %v722, %v740
        %v746 = vadd.f32 %v723, %v740
        %v747 = vadd.f32 %v724, %v740
        %v748 = vadd.f32 %v725, %v740
        %v749 = vadd.f32 %v726, %v740
        %v750 = vadd.f32 %v727, %v740
        %v751 = vadd.f32 %v728, %v740
        %v752 = vadd.f32 %v729, %v740
        %v753 = vadd.f32 %v730, %v740
        %v754 = vadd.f32 %v731, %v740
        %v755 = vadd.f32 %v732, %v740
        %v756 = vadd.f32 %v733, %v740
        %v757 = vadd.f32 %v734, %v740
        %v758 = vmax.f32 %v742, 0.0
        %v759 = vmax.f32 %v743, 0.0
        %v760 = vmax.f32 %v744, 0.0
        %v761 = vmax.f32 %v745, 0.0
        %v762 = vmax.f32 %v746, 0.0
        %v763 = vmax.f32 %v747, 0.0
        %v764 = vmax.f32 %v748, 0.0
        %v765 = vmax.f32 %v749, 0.0
        %v766 = vmax.f32 %v750, 0.0
        %v767 = vmax.f32 %v751, 0.0
        %v768 = vmax.f32 %v752, 0.0
        %v769 = vmax.f32 %v753, 0.0
        %v770 = vmax.f32 %v754, 0.0
        %v771 = vmax.f32 %v755, 0.0
        %v772 = vmax.f32 %v756, 0.0
        %v773 = vmax.f32 %v757, 0.0
        %v774 = vpack.c.bf16 %v759, %v758
        %v775 = vpack.c.bf16 %v761, %v760
        %v776 = vpack.c.bf16 %v763, %v762
        %v777 = vpack.c.bf16 %v765, %v764
        %v778 = vpack.c.bf16 %v767, %v766
        %v779 = vpack.c.bf16 %v769, %v768
        %v780 = vpack.c.bf16 %v771, %v770
        %v781 = vpack.c.bf16 %v773, %v772
        %v782 = vld [vmem:[%s4] sm:$0xf]
        %v783 = vld [vmem:[%s4 + $0x4] sm:$0xf]
        %v784 = vld [vmem:[%s4 + $0x8] sm:$0xf]
        %v785 = vld [vmem:[%s4 + $0xc] sm:$0xf]
        %v786 = vld [vmem:[%s4 + $0x10] sm:$0xf]
        %v787 = vld [vmem:[%s4 + $0x14] sm:$0xf]
        %v788 = vld [vmem:[%s4 + $0x18] sm:$0xf]
        %v789 = vld [vmem:[%s4 + $0x1c] sm:$0xf]
        %v790 = vld [vmem:[%s4 + $0x20] sm:$0xf]
        %v791 = vld [vmem:[%s4 + $0x24] sm:$0xf]
        %v792 = vld [vmem:[%s4 + $0x28] sm:$0xf]
        %v793 = vld [vmem:[%s4 + $0x2c] sm:$0xf]
        %v794 = vld [vmem:[%s4 + $0x30] sm:$0xf]
        %v795 = vld [vmem:[%s4 + $0x34] sm:$0xf]
        %v796 = vld [vmem:[%s4 + $0x38] sm:$0xf]
        %v797 = vld [vmem:[%s4 + $0x3c] sm:$0xf]
        %v814 = vunpack.c.l.b16 %v782
        %v815 = vunpack.c.l.b16 %v783
        %v816 = vunpack.c.l.b16 %v784
        %v817 = vunpack.c.l.b16 %v785
        %v818 = vunpack.c.l.b16 %v786
        %v819 = vunpack.c.l.b16 %v787
        %v820 = vunpack.c.l.b16 %v788
        %v821 = vunpack.c.l.b16 %v789
        %v822 = vunpack.c.l.b16 %v790
        %v823 = vunpack.c.l.b16 %v791
        %v824 = vunpack.c.l.b16 %v792
        %v825 = vunpack.c.l.b16 %v793
        %v826 = vunpack.c.l.b16 %v794
        %v827 = vunpack.c.l.b16 %v795
        %v828 = vunpack.c.l.b16 %v796
        %v829 = vunpack.c.l.b16 %v797
        %v830 = vpack.c.b16 %v815, %v814
        %v831 = vpack.c.b16 %v817, %v816
        %v832 = vpack.c.b16 %v819, %v818
        %v833 = vpack.c.b16 %v821, %v820
        %v834 = vpack.c.b16 %v823, %v822
        %v835 = vpack.c.b16 %v825, %v824
        %v836 = vpack.c.b16 %v827, %v826
        %v837 = vpack.c.b16 %v829, %v828
        %846 = vmatprep.subr.bf16.mxu0 0
        %847 = vmatpush1.bf16.msra.mxu0 %v830
        %848 = vmatprep.subr.bf16.mxu0 0
        %849 = vmatpush1.bf16.msra.mxu0 %v831
        %850 = vmatprep.subr.bf16.mxu0 0
        %851 = vmatpush1.bf16.msra.mxu0 %v832
        %852 = vmatprep.subr.bf16.mxu0 0
        %853 = vmatpush1.bf16.msra.mxu0 %v833
        %854 = vmatprep.subr.bf16.mxu0 0
        %855 = vmatpush1.bf16.msra.mxu0 %v834
        %856 = vmatprep.subr.bf16.mxu0 0
        %857 = vmatpush1.bf16.msra.mxu0 %v835
        %858 = vmatprep.subr.bf16.mxu0 0
        %859 = vmatpush1.bf16.msra.mxu0 %v836
        %860 = vmatprep.subr.bf16.mxu0 0
        %861 = vmatpush1.bf16.msra.mxu0 %v837
        %862 = vmatprep.subr.bf16.mxu0 0
        %863 = vmatpush1.bf16.msra.mxu0 0
        %864 = vmatprep.subr.bf16.mxu0 0
        %865 = vmatpush1.bf16.msra.mxu0 0
        %866 = vmatprep.subr.bf16.mxu0 0
        %867 = vmatpush1.bf16.msra.mxu0 0
        %868 = vmatprep.subr.bf16.mxu0 0
        %869 = vmatpush1.bf16.msra.mxu0 0
        %870 = vmatprep.subr.bf16.mxu0 0
        %871 = vmatpush1.bf16.msra.mxu0 0
        %872 = vmatprep.subr.bf16.mxu0 0
        %873 = vmatpush1.bf16.msra.mxu0 0
        %874 = vmatprep.subr.bf16.mxu0 0
        %875 = vmatpush1.bf16.msra.mxu0 0
        %876 = vmatprep.subr.bf16.mxu0 0
        %877 = vmatpush1.bf16.msra.mxu0 0
        %878 = vmatprep.mubr.bf16.mxu0 0
        %879 = vmatmul.mubr.bf16.gmra.mrb[0].mxu0 %v774
        %v880 = vpop.f32.mrb[0].mxu0
        %v881 = vadd.f32 0.0, %v880
        %v882 = vpop.f32.mrb[0].mxu0
        %v883 = vpop.f32.mrb[0].mxu0
        %v884 = vadd.f32 0.0, %v883
        %v885 = vpop.f32.mrb[0].mxu0
        %886 = vmatprep.mubr.bf16.mxu0 0
        %887 = vmatmul.mubr.bf16.gmra.mrb[0].mxu0 %v775
        %v888 = vpop.f32.mrb[0].mxu0
        %v889 = vadd.f32 0.0, %v888
        %v890 = vpop.f32.mrb[0].mxu0
        %v891 = vpop.f32.mrb[0].mxu0
        %v892 = vadd.f32 0.0, %v891
        %v893 = vpop.f32.mrb[0].mxu0
        %894 = vmatprep.mubr.bf16.mxu0 0
        %895 = vmatmul.mubr.bf16.gmra.mrb[0].mxu0 %v776
        %v896 = vpop.f32.mrb[0].mxu0
        %v897 = vadd.f32 0.0, %v896
        %v898 = vpop.f32.mrb[0].mxu0
        %v899 = vpop.f32.mrb[0].mxu0
        %v900 = vadd.f32 0.0, %v899
        %v901 = vpop.f32.mrb[0].mxu0
        %902 = vmatprep.mubr.bf16.mxu0 0
        %903 = vmatmul.mubr.bf16.gmra.mrb[0].mxu0 %v777
        %v904 = vpop.f32.mrb[0].mxu0
        %v905 = vadd.f32 0.0, %v904
        %v906 = vpop.f32.mrb[0].mxu0
        %v907 = vpop.f32.mrb[0].mxu0
        %v908 = vadd.f32 0.0, %v907
        %v909 = vpop.f32.mrb[0].mxu0
        %910 = vmatprep.mubr.bf16.mxu0 0
        %911 = vmatmul.mubr.bf16.gmra.mrb[0].mxu0 %v778
        %v912 = vpop.f32.mrb[0].mxu0
        %v913 = vadd.f32 0.0, %v912
        %v914 = vpop.f32.mrb[0].mxu0
        %v915 = vpop.f32.mrb[0].mxu0
        %v916 = vadd.f32 0.0, %v915
        %v917 = vpop.f32.mrb[0].mxu0
        %918 = vmatprep.mubr.bf16.mxu0 0
        %919 = vmatmul.mubr.bf16.gmra.mrb[0].mxu0 %v779
        %v920 = vpop.f32.mrb[0].mxu0
        %v921 = vadd.f32 0.0, %v920
        %v922 = vpop.f32.mrb[0].mxu0
        %v923 = vpop.f32.mrb[0].mxu0
        %v924 = vadd.f32 0.0, %v923
        %v925 = vpop.f32.mrb[0].mxu0
        %926 = vmatprep.mubr.bf16.mxu0 0
        %927 = vmatmul.mubr.bf16.gmra.mrb[0].mxu0 %v780
        %v928 = vpop.f32.mrb[0].mxu0
        %v929 = vadd.f32 0.0, %v928
        %v930 = vpop.f32.mrb[0].mxu0
        %v931 = vpop.f32.mrb[0].mxu0
        %v932 = vadd.f32 0.0, %v931
        %v933 = vpop.f32.mrb[0].mxu0
        %934 = vmatprep.mubr.bf16.mxu0 0
        %935 = vmatmul.mubr.bf16.gmra.mrb[0].mxu0 %v781
        %v936 = vpop.f32.mrb[0].mxu0
        %v937 = vadd.f32 0.0, %v936
        %v938 = vpop.f32.mrb[0].mxu0
        %v939 = vpop.f32.mrb[0].mxu0
        %v940 = vadd.f32 0.0, %v939
        %v941 = vpop.f32.mrb[0].mxu0
        %942 = vdwg.mxu0
        %v943 = vmul.f32 %v642, %v881
        %v944 = vmul.f32 %v647, %v884
        %v945 = vmul.f32 %v652, %v889
        %v946 = vmul.f32 %v657, %v892
        %v947 = vmul.f32 %v662, %v897
        %v948 = vmul.f32 %v667, %v900
        %v949 = vmul.f32 %v672, %v905
        %v950 = vmul.f32 %v677, %v908
        %v951 = vmul.f32 %v682, %v913
        %v952 = vmul.f32 %v687, %v916
        %v953 = vmul.f32 %v692, %v921
        %v954 = vmul.f32 %v697, %v924
        %v955 = vmul.f32 %v702, %v929
        %v956 = vmul.f32 %v707, %v932
        %v957 = vmul.f32 %v712, %v937
        %v958 = vmul.f32 %v717, %v940
        %v959 = vpack.c.bf16 %v944, %v943
        %v960 = vpack.c.bf16 %v946, %v945
        %v961 = vpack.c.bf16 %v948, %v947
        %v962 = vpack.c.bf16 %v950, %v949
        %v963 = vpack.c.bf16 %v952, %v951
        %v964 = vpack.c.bf16 %v954, %v953
        %v965 = vpack.c.bf16 %v956, %v955
        %v966 = vpack.c.bf16 %v958, %v957
        %v975 = vunpack.c.l.b16 %v959
        %v976 = vunpack.c.h.b16 %v959
        %v977 = vunpack.c.l.b16 %v960
        %v978 = vunpack.c.h.b16 %v960
        %v979 = vunpack.c.l.b16 %v961
        %v980 = vunpack.c.h.b16 %v961
        %v981 = vunpack.c.l.b16 %v962
        %v982 = vunpack.c.h.b16 %v962
        %v983 = vunpack.c.l.b16 %v963
        %v984 = vunpack.c.h.b16 %v963
        %v985 = vunpack.c.l.b16 %v964
        %v986 = vunpack.c.h.b16 %v964
        %v987 = vunpack.c.l.b16 %v965
        %v988 = vunpack.c.h.b16 %v965
        %v989 = vunpack.c.l.b16 %v966
        %v990 = vunpack.c.h.b16 %v966
        %v991 = vpack.c.b16 %v975, %v975
        %v992 = vpack.c.b16 %v976, %v976
        %v993 = vpack.c.b16 %v977, %v977
        %v994 = vpack.c.b16 %v978, %v978
        %v995 = vpack.c.b16 %v979, %v979
        %v996 = vpack.c.b16 %v980, %v980
        %v997 = vpack.c.b16 %v981, %v981
        %v998 = vpack.c.b16 %v982, %v982
        %v999 = vpack.c.b16 %v983, %v983
        %v1000 = vpack.c.b16 %v984, %v984
        %v1001 = vpack.c.b16 %v985, %v985
        %v1002 = vpack.c.b16 %v986, %v986
        %v1003 = vpack.c.b16 %v987, %v987
        %v1004 = vpack.c.b16 %v988, %v988
        %v1005 = vpack.c.b16 %v989, %v989
        %v1006 = vpack.c.b16 %v990, %v990
        %1023 = vst [vmem:[%s279] sm:$0xf] %v991
        %1024 = vst [vmem:[%s279 + $0x4] sm:$0xf] %v992
        %1025 = vst [vmem:[%s279 + $0x8] sm:$0xf] %v993
        %1026 = vst [vmem:[%s279 + $0xc] sm:$0xf] %v994
        %1027 = vst [vmem:[%s279 + $0x10] sm:$0xf] %v995
        %1028 = vst [vmem:[%s279 + $0x14] sm:$0xf] %v996
        %1029 = vst [vmem:[%s279 + $0x18] sm:$0xf] %v997
        %1030 = vst [vmem:[%s279 + $0x1c] sm:$0xf] %v998
        %1031 = vst [vmem:[%s279 + $0x20] sm:$0xf] %v999
        %1032 = vst [vmem:[%s279 + $0x24] sm:$0xf] %v1000
        %1033 = vst [vmem:[%s279 + $0x28] sm:$0xf] %v1001
        %1034 = vst [vmem:[%s279 + $0x2c] sm:$0xf] %v1002
        %1035 = vst [vmem:[%s279 + $0x30] sm:$0xf] %v1003
        %1036 = vst [vmem:[%s279 + $0x34] sm:$0xf] %v1004
        %1037 = vst [vmem:[%s279 + $0x38] sm:$0xf] %v1005
        %1038 = vst [vmem:[%s279 + $0x3c] sm:$0xf] %v1006
      $region48: #{encoder_forward.4} parent=39 // pred_fallthru
        _
      %s1039 = smul.u32 16, %s20
      %p1040 = scmp.lt.s32.totalorder %s1039, 31
      %s1041 = scalar_select %p1040, %s1039, 31
      %s1042 = smul.addr %s1041, 4
      %s1043 = scalar_lea.vmem %s5, %s1042
      // Predicated region
      $region49: #{encoder_forward.4} parent=39 // pred_check
        %p1044 = pneg %p163
      $region50: #{encoder_forward.4} parent=39 // pred_check_branch
        %1046 = sbr.rel (%p1044) target = $region52
      $region51: #{encoder_forward.4} parent=39 // pred_region
        %s1047 = smul.u32 16, %s20
      $region52: #{encoder_forward.4} parent=39 // pred_fallthru
        _
    $region40: #{encoder_forward.4} parent=5 // pred_fallthru
      _
    %p1048 = scmp.le.s32.totalorder 2, %s11
    // Predicated region
    $region53: #{encoder_forward.4} parent=5 // pred_check
      %p1049 = pneg %p1048
    $region54: #{encoder_forward.4} parent=5 // pred_check_branch
      %1051 = sbr.rel (%p1049) target = $region56
    $region55: #{encoder_forward.4} parent=5 // pred_region
      %s1052 = ssub.s32 %s11, 2
      // Predicated region
      $region57: #{encoder_forward.4} parent=55 // pred_check
        %p1053 = pneg %p169
      $region58: #{encoder_forward.4} parent=55 // pred_check_branch
        %1055 = sbr.rel (%p1053) target = $region60
      $region59: #{encoder_forward.4} parent=55 // pred_region
        %s1056 = smul.u32 16, %s22
        %p1057 = scmp.lt.s32.totalorder %s1056, 31
        %s1058 = scalar_select %p1057, %s1056, 31
        %s1059 = smul.addr %s1058, 4
        %s1060 = scalar_lea.vmem %s5, %s1059
      $region60: #{encoder_forward.4} parent=55 // pred_fallthru
        _
    $region56: #{encoder_forward.4} parent=5 // pred_fallthru
      _
  $region6: #{encoder_forward.4} parent=0 // loop_footer
    %s15 = sadd.s32 1, %s11
  $region7: #{encoder_forward.4} parent=0 // loop_footer_branch
    %10 = sbr.rel target = $region3
  $region8: #{encoder_forward.4} parent=0 // loop_exit
    _

// kernel: encoder_forward.5
$region0: #{encoder_forward.5}
  #allocation0 [shape = 'u32[]', space=smem, size = 0x4, offset = 0x4, fixed_abs, tag = 'smem constant byte address 0x4 - core index']
  #allocation1 [shape = 'u32[144,128]{1,0:T(1,128)}', space=vmem, size = 0x12000, scoped, tag = 'internal scratch']
  %s0 = inlined_call_operand.vmem [shape: s8[256,256], index: 0, kind: input, shape index: {}]
  %s1 = inlined_call_operand.vmem [shape: bf16[256,128], index: 1, kind: input, shape index: {}]
  %s2 = inlined_call_operand.vmem [shape: f32[256,1], index: 2, kind: input, shape index: {}]
  %s3 = inlined_call_operand.vmem [shape: f32[1,128], index: 3, kind: input, shape index: {}]
  %s4 = inlined_call_operand.vmem [shape: f32[256,128], index: 4, kind: output, shape index: {}]
  %s5 = sld [smem:[#allocation0]]
  $region57: #{encoder_forward.5} parent=0
    _
  %s7 = ssub.s32 1, %s5
  %s8 = scalar_select 0, %s7, %s5
  loop: start=0, step=1, limit=4
  $region2: #{encoder_forward.5} parent=0 // loop_pre_header
    _
  $region3: #{encoder_forward.5} parent=0 // loop_header
    %s10 = sphi 0, %s14
    %p11 = scmp.ge.s32.totalorder %s10, 4
    %s17 = sphi 0, %s29
    %s18 = sphi 0, %s25
    %s19 = sphi 0, %s17
    %s20 = sphi 0, %s18
    %s21 = sphi 0, %s19
    %s22 = sphi 0, %s20
    %s34 = sphi 0, %s36
    %s37 = sphi 0, %s34
    %s38 = sphi 0, %s37
    %s54 = sphi 0, %s38
    %s58 = sphi 0, %s58
    %s60 = sphi 0, %s58
    %s61 = sphi 0, %s60
    %s75 = sphi 0, %s61
    %s81 = sphi 0, %s83
    %s84 = sphi 0, %s81
    %s85 = sphi 0, %s84
    %s101 = sphi 0, %s85
    %s105 = sphi 0, %s105
    %s107 = sphi 0, %s105
    %s108 = sphi 0, %s107
    %s122 = sphi 0, %s108
    %s128 = sphi 0, %s130
    %s131 = sphi 0, %s128
    %s132 = sphi 0, %s131
    %s148 = sphi 0, %s132
  $region4: #{encoder_forward.5} parent=0 // loop_header_branch
    %13 = sbr.rel (%p11) target = $region8
  $region5: #{encoder_forward.5} parent=0 // loop_body
    %s15 = ssub.s32 %s10, 1
    %s16 = ssub.s32 %s10, 2
    %s23 = sadd.s32 1, %s18
    %p24 = scmp.ge.s32.totalorder %s23, 1
    %s25 = scalar_select %p24, 0, %s23
    %s26 = sadd.s32 1, %s17
    %s27 = scalar_select %p24, %s26, %s17
    %p28 = scmp.ge.s32.totalorder %s27, 2
    %s29 = scalar_select %p28, 0, %s27
    %s30 = ssub.s32 %s17, %s29
    %s31 = ssub.s32 %s18, %s25
    %s32 = sor.u32 %s30, %s31
    %p33 = scmp.eq.s32.totalorder %s32, 0
    %s35 = sadd.s32 %s34, 1
    %s36 = scalar_select %p33, %s34, %s35
    %p39 = pneg %p33
    %p40 = scmp.eq.s32.totalorder %s10, 1
    %p41 = por %p39, %p40
    %p42 = scmp.ne.s32.totalorder %s34, %s37
    %p43 = scmp.eq.s32.totalorder %s10, 0
    %p44 = por %p42, %p43
    %p45 = scmp.ne.s32.totalorder %s34, %s37
    %p46 = scmp.eq.s32.totalorder %s15, 1
    %p47 = por %p45, %p46
    %p48 = scmp.ne.s32.totalorder %s37, %s38
    %p49 = scmp.eq.s32.totalorder %s15, 0
    %p50 = por %p48, %p49
    %p51 = scmp.ne.s32.totalorder %s37, %s38
    %p52 = scmp.eq.s32.totalorder %s16, 1
    %p53 = por %p51, %p52
    %p55 = scmp.ne.s32.totalorder %s38, %s54
    %p56 = scmp.eq.s32.totalorder %s16, 0
    %p57 = por %p55, %p56
    %s59 = sadd.s32 %s58, 1
    %p62 = scmp.eq.s32.totalorder %s10, 1
    %p63 = scmp.ne.s32.totalorder %s58, %s60
    %p64 = scmp.eq.s32.totalorder %s10, 0
    %p65 = por %p63, %p64
    %p66 = scmp.ne.s32.totalorder %s58, %s60
    %p67 = scmp.eq.s32.totalorder %s15, 1
    %p68 = por %p66, %p67
    %p69 = scmp.ne.s32.totalorder %s60, %s61
    %p70 = scmp.eq.s32.totalorder %s15, 0
    %p71 = por %p69, %p70
    %p72 = scmp.ne.s32.totalorder %s60, %s61
    %p73 = scmp.eq.s32.totalorder %s16, 1
    %p74 = por %p72, %p73
    %p76 = scmp.ne.s32.totalorder %s61, %s75
    %p77 = scmp.eq.s32.totalorder %s16, 0
    %p78 = por %p76, %p77
    %s79 = ssub.s32 %s17, %s29
    %p80 = scmp.eq.s32.totalorder %s79, 0
    %s82 = sadd.s32 %s81, 1
    %s83 = scalar_select %p80, %s81, %s82
    %p86 = pneg %p80
    %p87 = scmp.eq.s32.totalorder %s10, 1
    %p88 = por %p86, %p87
    %p89 = scmp.ne.s32.totalorder %s81, %s84
    %p90 = scmp.eq.s32.totalorder %s10, 0
    %p91 = por %p89, %p90
    %p92 = scmp.ne.s32.totalorder %s81, %s84
    %p93 = scmp.eq.s32.totalorder %s15, 1
    %p94 = por %p92, %p93
    %p95 = scmp.ne.s32.totalorder %s84, %s85
    %p96 = scmp.eq.s32.totalorder %s15, 0
    %p97 = por %p95, %p96
    %p98 = scmp.ne.s32.totalorder %s84, %s85
    %p99 = scmp.eq.s32.totalorder %s16, 1
    %p100 = por %p98, %p99
    %p102 = scmp.ne.s32.totalorder %s85, %s101
    %p103 = scmp.eq.s32.totalorder %s16, 0
    %p104 = por %p102, %p103
    %s106 = sadd.s32 %s105, 1
    %p109 = scmp.eq.s32.totalorder %s10, 1
    %p110 = scmp.ne.s32.totalorder %s105, %s107
    %p111 = scmp.eq.s32.totalorder %s10, 0
    %p112 = por %p110, %p111
    %p113 = scmp.ne.s32.totalorder %s105, %s107
    %p114 = scmp.eq.s32.totalorder %s15, 1
    %p115 = por %p113, %p114
    %p116 = scmp.ne.s32.totalorder %s107, %s108
    %p117 = scmp.eq.s32.totalorder %s15, 0
    %p118 = por %p116, %p117
    %p119 = scmp.ne.s32.totalorder %s107, %s108
    %p120 = scmp.eq.s32.totalorder %s16, 1
    %p121 = por %p119, %p120
    %p123 = scmp.ne.s32.totalorder %s108, %s122
    %p124 = scmp.eq.s32.totalorder %s16, 0
    %p125 = por %p123, %p124
    %s126 = ssub.s32 %s17, %s29
    %p127 = scmp.eq.s32.totalorder %s126, 0
    %s129 = sadd.s32 %s128, 1
    %s130 = scalar_select %p127, %s128, %s129
    %p133 = pneg %p127
    %p134 = scmp.eq.s32.totalorder %s10, 1
    %p135 = por %p133, %p134
    %p136 = scmp.ne.s32.totalorder %s128, %s131
    %p137 = scmp.eq.s32.totalorder %s10, 0
    %p138 = por %p136, %p137
    %p139 = scmp.ne.s32.totalorder %s128, %s131
    %p140 = scmp.eq.s32.totalorder %s15, 1
    %p141 = por %p139, %p140
    %p142 = scmp.ne.s32.totalorder %s131, %s132
    %p143 = scmp.eq.s32.totalorder %s15, 0
    %p144 = por %p142, %p143
    %p145 = scmp.ne.s32.totalorder %s131, %s132
    %p146 = scmp.eq.s32.totalorder %s16, 1
    %p147 = por %p145, %p146
    %p149 = scmp.ne.s32.totalorder %s132, %s148
    %p150 = scmp.eq.s32.totalorder %s16, 0
    %p151 = por %p149, %p150
    %p152 = scmp.le.s32.totalorder 1, %s10
    %p153 = scmp.lt.s32.totalorder %s10, 3
    %p154 = pnand %p152, %p153
    %p155 = pneg %p154
    // Predicated region
    $region9: #{encoder_forward.5} parent=5 // pred_check
      _
    $region10: #{encoder_forward.5} parent=5 // pred_check_branch
      %157 = sbr.rel (%p154) target = $region12
    $region11: #{encoder_forward.5} parent=5 // pred_region
      %s158 = ssub.s32 %s10, 1
      // Predicated region
      $region13: #{encoder_forward.5} parent=11 // pred_check
        %p159 = pneg %p71
      $region14: #{encoder_forward.5} parent=11 // pred_check_branch
        %161 = sbr.rel (%p159) target = $region16
      $region15: #{encoder_forward.5} parent=11 // pred_region
        _
      $region16: #{encoder_forward.5} parent=11 // pred_fallthru
        _
      // Predicated region
      $region17: #{encoder_forward.5} parent=11 // pred_check
        %p162 = pneg %p118
      $region18: #{encoder_forward.5} parent=11 // pred_check_branch
        %164 = sbr.rel (%p162) target = $region20
      $region19: #{encoder_forward.5} parent=11 // pred_region
        _
      $region20: #{encoder_forward.5} parent=11 // pred_fallthru
        _
    $region12: #{encoder_forward.5} parent=5 // pred_fallthru
      _
    %p165 = scmp.lt.s32.totalorder %s10, 2
    // Predicated region
    $region21: #{encoder_forward.5} parent=5 // pred_check
      %p166 = pneg %p165
    $region22: #{encoder_forward.5} parent=5 // pred_check_branch
      %168 = sbr.rel (%p166) target = $region24
    $region23: #{encoder_forward.5} parent=5 // pred_region
      // Predicated region
      $region25: #{encoder_forward.5} parent=23 // pred_check
        %p169 = pneg %p44
      $region26: #{encoder_forward.5} parent=23 // pred_check_branch
        %171 = sbr.rel (%p169) target = $region28
      $region27: #{encoder_forward.5} parent=23 // pred_region
        %s172 = smul.u32 4, %s17
        %s173 = smul.u32 2, %s18
        %p174 = scmp.lt.s32.totalorder %s172, 7
        %s175 = scalar_select %p174, %s172, 7
        %p176 = scmp.lt.s32.totalorder %s173, 1
        %s177 = scalar_select %p176, %s173, 1
        %s178 = smul.addr %s175, 2
        %s179 = sadd.s32 %s177, %s178
        %s180 = smul.addr %s179, 8
        %s181 = scalar_lea.vmem %s0, %s180
        %s182 = smul.u32 4, %s17
        %s183 = smul.u32 2, %s18
      $region28: #{encoder_forward.5} parent=23 // pred_fallthru
        _
      // Predicated region
      $region29: #{encoder_forward.5} parent=23 // pred_check
        %p184 = pneg %p91
      $region30: #{encoder_forward.5} parent=23 // pred_check_branch
        %186 = sbr.rel (%p184) target = $region32
      $region31: #{encoder_forward.5} parent=23 // pred_region
        %s187 = smul.u32 16, %s17
        %p188 = scmp.lt.s32.totalorder %s187, 31
        %s189 = scalar_select %p188, %s187, 31
        %s190 = smul.addr %s189, 8
        %s191 = scalar_lea.vmem %s2, %s190
        %s192 = smul.u32 16, %s17
      $region32: #{encoder_forward.5} parent=23 // pred_fallthru
        _
    $region24: #{encoder_forward.5} parent=5 // pred_fallthru
      _
    %p193 = scmp.le.s32.totalorder 1, %s10
    %p194 = scmp.lt.s32.totalorder %s10, 3
    %p195 = pnand %p193, %p194
    %p196 = pneg %p195
    // Predicated region
    $region33: #{encoder_forward.5} parent=5 // pred_check
      _
    $region34: #{encoder_forward.5} parent=5 // pred_check_branch
      %198 = sbr.rel (%p195) target = $region36
    $region35: #{encoder_forward.5} parent=5 // pred_region
      %s199 = ssub.s32 %s10, 1
      %s200 = smul.u32 4, %s19
      %s201 = smul.u32 2, %s20
      %p202 = scmp.lt.s32.totalorder %s200, 7
      %s203 = scalar_select %p202, %s200, 7
      %p204 = scmp.lt.s32.totalorder %s201, 1
      %s205 = scalar_select %p204, %s201, 1
      %s206 = smul.addr %s203, 2
      %s207 = sadd.s32 %s205, %s206
      %s208 = smul.addr %s207, 8
      %s209 = scalar_lea.vmem %s0, %s208
      %p210 = pneg %p50
      %p211 = pneg %p47
      %p212 = pneg %p71
      %p213 = pneg %p68
      %s214 = smul.u32 16, %s19
      %p215 = scmp.lt.s32.totalorder %s214, 31
      %s216 = scalar_select %p215, %s214, 31
      %s217 = smul.addr %s216, 8
      %s218 = scalar_lea.vmem %s2, %s217
      %p219 = pneg %p97
      %p220 = pneg %p94
      %p221 = pneg %p118
      %p222 = pneg %p115
      %p223 = pneg %p144
      %p224 = pneg %p141
      %s225 = smul.u32 16, %s19
      %p226 = scmp.lt.s32.totalorder %s225, 31
      %s227 = scalar_select %p226, %s225, 31
      %s228 = smul.addr %s227, 8
      %s229 = scalar_lea.vmem %s4, %s228
      %s230 = smul.u32 4, %s19
      %s231 = smul.u32 2, %s20
      %p232 = scmp.lt.s32.totalorder %s230, 7
      %s233 = scalar_select %p232, %s230, 7
      %p234 = scmp.lt.s32.totalorder %s231, 1
      %s235 = scalar_select %p234, %s231, 1
      %s236 = smul.addr %s233, 2
      %s237 = sadd.s32 %s235, %s236
      %s238 = smul.addr %s237, 8
      %s239 = scalar_lea.vmem %s0, %s238
      %s240 = smul.u32 4, %s19
      %s241 = smul.u32 2, %s20
      %s242 = smul.u32 16, %s19
      %p243 = scmp.lt.s32.totalorder %s242, 31
      %s244 = scalar_select %p243, %s242, 31
      %s245 = smul.addr %s244, 8
      %s246 = scalar_lea.vmem %s2, %s245
      %s247 = smul.u32 16, %s19
      %s248 = smul.u32 16, %s19
      %p249 = scmp.lt.s32.totalorder %s248, 31
      %s250 = scalar_select %p249, %s248, 31
      %s251 = smul.addr %s250, 8
      %s252 = scalar_lea.vmem %s4, %s251
      %s253 = smul.u32 16, %s19
      %p255 = scmp.eq.s32.totalorder %s20, 0
      // Predicated region
      $region37: #{encoder_forward.5} parent=35 // pred_check
        %p256 = pneg %p255
      $region38: #{encoder_forward.5} parent=35 // pred_check_branch
        %258 = sbr.rel (%p256) target = $region40
      $region39: #{encoder_forward.5} parent=35 // pred_region
        %259 = vst [vmem:[%s252] sm:$0xff] 0.0
        %260 = vst [vmem:[%s252 + $0x8] sm:$0xff] 0.0
        %261 = vst [vmem:[%s252 + $0x10] sm:$0xff] 0.0
        %262 = vst [vmem:[%s252 + $0x18] sm:$0xff] 0.0
        %263 = vst [vmem:[%s252 + $0x20] sm:$0xff] 0.0
        %264 = vst [vmem:[%s252 + $0x28] sm:$0xff] 0.0
        %265 = vst [vmem:[%s252 + $0x30] sm:$0xff] 0.0
        %266 = vst [vmem:[%s252 + $0x38] sm:$0xff] 0.0
        %267 = vst [vmem:[%s252 + $0x40] sm:$0xff] 0.0
        %268 = vst [vmem:[%s252 + $0x48] sm:$0xff] 0.0
        %269 = vst [vmem:[%s252 + $0x50] sm:$0xff] 0.0
        %270 = vst [vmem:[%s252 + $0x58] sm:$0xff] 0.0
        %271 = vst [vmem:[%s252 + $0x60] sm:$0xff] 0.0
        %272 = vst [vmem:[%s252 + $0x68] sm:$0xff] 0.0
        %273 = vst [vmem:[%s252 + $0x70] sm:$0xff] 0.0
        %274 = vst [vmem:[%s252 + $0x78] sm:$0xff] 0.0
      $region40: #{encoder_forward.5} parent=35 // pred_fallthru
        _
      %s275 = smul.u32 %s20, 256
      %s276 = sshra.s32 %s275, 3
      %s277 = sand.u32 %s275, 7
      %s278 = smul.addr %s276, 4
      %s279 = scalar_lea.vmem %s1, %s278
      %v280 = vld [vmem:[%s279] sm:$0xf]
      %v281 = vld [vmem:[%s279 + $0x4] sm:$0xf]
      %v282 = vld [vmem:[%s279 + $0x8] sm:$0xf]
      %v283 = vld [vmem:[%s279 + $0xc] sm:$0xf]
      %v284 = vld [vmem:[%s279 + $0x10] sm:$0xf]
      %v285 = vld [vmem:[%s279 + $0x14] sm:$0xf]
      %v286 = vld [vmem:[%s279 + $0x18] sm:$0xf]
      %v287 = vld [vmem:[%s279 + $0x1c] sm:$0xf]
      %v288 = vld [vmem:[%s279 + $0x20] sm:$0xf]
      %v289 = vld [vmem:[%s279 + $0x24] sm:$0xf]
      %v290 = vld [vmem:[%s279 + $0x28] sm:$0xf]
      %v291 = vld [vmem:[%s279 + $0x2c] sm:$0xf]
      %v292 = vld [vmem:[%s279 + $0x30] sm:$0xf]
      %v293 = vld [vmem:[%s279 + $0x34] sm:$0xf]
      %v294 = vld [vmem:[%s279 + $0x38] sm:$0xf]
      %v295 = vld [vmem:[%s279 + $0x3c] sm:$0xf]
      %v296 = vld [vmem:[%s279 + $0x40] sm:$0xf]
      %v297 = vld [vmem:[%s279 + $0x44] sm:$0xf]
      %v298 = vld [vmem:[%s279 + $0x48] sm:$0xf]
      %v299 = vld [vmem:[%s279 + $0x4c] sm:$0xf]
      %v300 = vld [vmem:[%s279 + $0x50] sm:$0xf]
      %v301 = vld [vmem:[%s279 + $0x54] sm:$0xf]
      %v302 = vld [vmem:[%s279 + $0x58] sm:$0xf]
      %v303 = vld [vmem:[%s279 + $0x5c] sm:$0xf]
      %v304 = vld [vmem:[%s279 + $0x60] sm:$0xf]
      %v305 = vld [vmem:[%s279 + $0x64] sm:$0xf]
      %v306 = vld [vmem:[%s279 + $0x68] sm:$0xf]
      %v307 = vld [vmem:[%s279 + $0x6c] sm:$0xf]
      %v308 = vld [vmem:[%s279 + $0x70] sm:$0xf]
      %v309 = vld [vmem:[%s279 + $0x74] sm:$0xf]
      %v310 = vld [vmem:[%s279 + $0x78] sm:$0xf]
      %v311 = vld [vmem:[%s279 + $0x7c] sm:$0xf]
      %v312 = vld [vmem:[%s252] sm:$0xff]
      %v313 = vld [vmem:[%s252 + $0x8] sm:$0xff]
      %v314 = vld [vmem:[%s252 + $0x10] sm:$0xff]
      %v315 = vld [vmem:[%s252 + $0x18] sm:$0xff]
      %v316 = vld [vmem:[%s252 + $0x20] sm:$0xff]
      %v317 = vld [vmem:[%s252 + $0x28] sm:$0xff]
      %v318 = vld [vmem:[%s252 + $0x30] sm:$0xff]
      %v319 = vld [vmem:[%s252 + $0x38] sm:$0xff]
      %v320 = vld [vmem:[%s252 + $0x40] sm:$0xff]
      %v321 = vld [vmem:[%s252 + $0x48] sm:$0xff]
      %v322 = vld [vmem:[%s252 + $0x50] sm:$0xff]
      %v323 = vld [vmem:[%s252 + $0x58] sm:$0xff]
      %v324 = vld [vmem:[%s252 + $0x60] sm:$0xff]
      %v325 = vld [vmem:[%s252 + $0x68] sm:$0xff]
      %v326 = vld [vmem:[%s252 + $0x70] sm:$0xff]
      %v327 = vld [vmem:[%s252 + $0x78] sm:$0xff]
      %v328 = vld [vmem:[%s239] sm:$0xff]
      %v329 = vld [vmem:[%s239 + $0x8] sm:$0xff]
      %v330 = vld [vmem:[%s239 + $0x10] sm:$0xff]
      %v331 = vld [vmem:[%s239 + $0x18] sm:$0xff]
      %v332 = vld [vmem:[%s239 + $0x20] sm:$0xff]
      %v333 = vld [vmem:[%s239 + $0x28] sm:$0xff]
      %v334 = vld [vmem:[%s239 + $0x30] sm:$0xff]
      %v335 = vld [vmem:[%s239 + $0x38] sm:$0xff]
      %v336 = vunpack.c.l.s8.bf16 %v328
      %v337 = vunpack.c.l.s8.bf16 %v329
      %v338 = vunpack.c.h.s8.bf16 %v328
      %v339 = vunpack.c.h.s8.bf16 %v329
      %v340 = vunpack.c.l.s8.bf16 %v330
      %v341 = vunpack.c.l.s8.bf16 %v331
      %v342 = vunpack.c.h.s8.bf16 %v330
      %v343 = vunpack.c.h.s8.bf16 %v331
      %v344 = vunpack.c.l.s8.bf16 %v332
      %v345 = vunpack.c.l.s8.bf16 %v333
      %v346 = vunpack.c.h.s8.bf16 %v332
      %v347 = vunpack.c.h.s8.bf16 %v333
      %v348 = vunpack.c.l.s8.bf16 %v334
      %v349 = vunpack.c.l.s8.bf16 %v335
      %v350 = vunpack.c.h.s8.bf16 %v334
      %v351 = vunpack.c.h.s8.bf16 %v335
      %v384 = vunpack.c.l.b16 %v280
      %v385 = vunpack.c.l.b16 %v281
      %v386 = vunpack.c.l.b16 %v282
      %v387 = vunpack.c.l.b16 %v283
      %v388 = vunpack.c.l.b16 %v284
      %v389 = vunpack.c.l.b16 %v285
      %v390 = vunpack.c.l.b16 %v286
      %v391 = vunpack.c.l.b16 %v287
      %v392 = vunpack.c.l.b16 %v288
      %v393 = vunpack.c.l.b16 %v289
      %v394 = vunpack.c.l.b16 %v290
      %v395 = vunpack.c.l.b16 %v291
      %v396 = vunpack.c.l.b16 %v292
      %v397 = vunpack.c.l.b16 %v293
      %v398 = vunpack.c.l.b16 %v294
      %v399 = vunpack.c.l.b16 %v295
      %v400 = vunpack.c.l.b16 %v296
      %v401 = vunpack.c.l.b16 %v297
      %v402 = vunpack.c.l.b16 %v298
      %v403 = vunpack.c.l.b16 %v299
      %v404 = vunpack.c.l.b16 %v300
      %v405 = vunpack.c.l.b16 %v301
      %v406 = vunpack.c.l.b16 %v302
      %v407 = vunpack.c.l.b16 %v303
      %v408 = vunpack.c.l.b16 %v304
      %v409 = vunpack.c.l.b16 %v305
      %v410 = vunpack.c.l.b16 %v306
      %v411 = vunpack.c.l.b16 %v307
      %v412 = vunpack.c.l.b16 %v308
      %v413 = vunpack.c.l.b16 %v309
      %v414 = vunpack.c.l.b16 %v310
      %v415 = vunpack.c.l.b16 %v311
      %v416 = vpack.c.b16 %v385, %v384
      %v417 = vpack.c.b16 %v387, %v386
      %v418 = vpack.c.b16 %v389, %v388
      %v419 = vpack.c.b16 %v391, %v390
      %v420 = vpack.c.b16 %v393, %v392
      %v421 = vpack.c.b16 %v395, %v394
      %v422 = vpack.c.b16 %v397, %v396
      %v423 = vpack.c.b16 %v399, %v398
      %v424 = vpack.c.b16 %v401, %v400
      %v425 = vpack.c.b16 %v403, %v402
      %v426 = vpack.c.b16 %v405, %v404
      %v427 = vpack.c.b16 %v407, %v406
      %v428 = vpack.c.b16 %v409, %v408
      %v429 = vpack.c.b16 %v411, %v410
      %v430 = vpack.c.b16 %v413, %v412
      %v431 = vpack.c.b16 %v415, %v414
      %448 = vmatprep.subr.bf16.mxu0 0
      %449 = vmatpush1.bf16.msra.mxu0 %v416
      %450 = vmatprep.subr.bf16.mxu0 0
      %451 = vmatpush1.bf16.msra.mxu0 %v417
      %452 = vmatprep.subr.bf16.mxu0 0
      %453 = vmatpush1.bf16.msra.mxu0 %v418
      %454 = vmatprep.subr.bf16.mxu0 0
      %455 = vmatpush1.bf16.msra.mxu0 %v419
      %456 = vmatprep.subr.bf16.mxu0 0
      %457 = vmatpush1.bf16.msra.mxu0 %v420
      %458 = vmatprep.subr.bf16.mxu0 0
      %459 = vmatpush1.bf16.msra.mxu0 %v421
      %460 = vmatprep.subr.bf16.mxu0 0
      %461 = vmatpush1.bf16.msra.mxu0 %v422
      %462 = vmatprep.subr.bf16.mxu0 0
      %463 = vmatpush1.bf16.msra.mxu0 %v423
      %464 = vmatprep.subr.bf16.mxu0 0
      %465 = vmatpush1.bf16.msra.mxu0 %v424
      %466 = vmatprep.subr.bf16.mxu0 0
      %467 = vmatpush1.bf16.msra.mxu0 %v425
      %468 = vmatprep.subr.bf16.mxu0 0
      %469 = vmatpush1.bf16.msra.mxu0 %v426
      %470 = vmatprep.subr.bf16.mxu0 0
      %471 = vmatpush1.bf16.msra.mxu0 %v427
      %472 = vmatprep.subr.bf16.mxu0 0
      %473 = vmatpush1.bf16.msra.mxu0 %v428
      %474 = vmatprep.subr.bf16.mxu0 0
      %475 = vmatpush1.bf16.msra.mxu0 %v429
      %476 = vmatprep.subr.bf16.mxu0 0
      %477 = vmatpush1.bf16.msra.mxu0 %v430
      %478 = vmatprep.subr.bf16.mxu0 0
      %479 = vmatpush1.bf16.msra.mxu0 %v431
      %480 = vmatprep.mubr.bf16.mxu0 %v337
      %481 = vmatmul.mubr.bf16.gmra.mrb[0].mxu0 %v336
      %v482 = vpop.f32.mrb[0].mxu0
      %v483 = vadd.f32 0.0, %v482
      %v484 = vpop.f32.mrb[0].mxu0
      %v485 = vpop.f32.mrb[0].mxu0
      %v486 = vadd.f32 0.0, %v485
      %v487 = vpop.f32.mrb[0].mxu0
      %488 = vmatprep.mubr.bf16.mxu0 %v339
      %489 = vmatmul.mubr.bf16.gmra.mrb[0].mxu0 %v338
      %v490 = vpop.f32.mrb[0].mxu0
      %v491 = vadd.f32 0.0, %v490
      %v492 = vpop.f32.mrb[0].mxu0
      %v493 = vpop.f32.mrb[0].mxu0
      %v494 = vadd.f32 0.0, %v493
      %v495 = vpop.f32.mrb[0].mxu0
      %496 = vmatprep.mubr.bf16.mxu0 %v341
      %497 = vmatmul.mubr.bf16.gmra.mrb[0].mxu0 %v340
      %v498 = vpop.f32.mrb[0].mxu0
      %v499 = vadd.f32 0.0, %v498
      %v500 = vpop.f32.mrb[0].mxu0
      %v501 = vpop.f32.mrb[0].mxu0
      %v502 = vadd.f32 0.0, %v501
      %v503 = vpop.f32.mrb[0].mxu0
      %504 = vmatprep.mubr.bf16.mxu0 %v343
      %505 = vmatmul.mubr.bf16.gmra.mrb[0].mxu0 %v342
      %v506 = vpop.f32.mrb[0].mxu0
      %v507 = vadd.f32 0.0, %v506
      %v508 = vpop.f32.mrb[0].mxu0
      %v509 = vpop.f32.mrb[0].mxu0
      %v510 = vadd.f32 0.0, %v509
      %v511 = vpop.f32.mrb[0].mxu0
      %512 = vmatprep.mubr.bf16.mxu0 %v345
      %513 = vmatmul.mubr.bf16.gmra.mrb[0].mxu0 %v344
      %v514 = vpop.f32.mrb[0].mxu0
      %v515 = vadd.f32 0.0, %v514
      %v516 = vpop.f32.mrb[0].mxu0
      %v517 = vpop.f32.mrb[0].mxu0
      %v518 = vadd.f32 0.0, %v517
      %v519 = vpop.f32.mrb[0].mxu0
      %520 = vmatprep.mubr.bf16.mxu0 %v347
      %521 = vmatmul.mubr.bf16.gmra.mrb[0].mxu0 %v346
      %v522 = vpop.f32.mrb[0].mxu0
      %v523 = vadd.f32 0.0, %v522
      %v524 = vpop.f32.mrb[0].mxu0
      %v525 = vpop.f32.mrb[0].mxu0
      %v526 = vadd.f32 0.0, %v525
      %v527 = vpop.f32.mrb[0].mxu0
      %528 = vmatprep.mubr.bf16.mxu0 %v349
      %529 = vmatmul.mubr.bf16.gmra.mrb[0].mxu0 %v348
      %v530 = vpop.f32.mrb[0].mxu0
      %v531 = vadd.f32 0.0, %v530
      %v532 = vpop.f32.mrb[0].mxu0
      %v533 = vpop.f32.mrb[0].mxu0
      %v534 = vadd.f32 0.0, %v533
      %v535 = vpop.f32.mrb[0].mxu0
      %536 = vmatprep.mubr.bf16.mxu0 %v351
      %537 = vmatmul.mubr.bf16.gmra.mrb[0].mxu0 %v350
      %v538 = vpop.f32.mrb[0].mxu0
      %v539 = vadd.f32 0.0, %v538
      %v540 = vpop.f32.mrb[0].mxu0
      %v541 = vpop.f32.mrb[0].mxu0
      %v542 = vadd.f32 0.0, %v541
      %v543 = vpop.f32.mrb[0].mxu0
      %544 = vdwg.mxu0
      %v545 = vadd.f32 %v312, %v483
      %v546 = vadd.f32 %v313, %v486
      %v547 = vadd.f32 %v314, %v491
      %v548 = vadd.f32 %v315, %v494
      %v549 = vadd.f32 %v316, %v499
      %v550 = vadd.f32 %v317, %v502
      %v551 = vadd.f32 %v318, %v507
      %v552 = vadd.f32 %v319, %v510
      %v553 = vadd.f32 %v320, %v515
      %v554 = vadd.f32 %v321, %v518
      %v555 = vadd.f32 %v322, %v523
      %v556 = vadd.f32 %v323, %v526
      %v557 = vadd.f32 %v324, %v531
      %v558 = vadd.f32 %v325, %v534
      %v559 = vadd.f32 %v326, %v539
      %v560 = vadd.f32 %v327, %v542
      %561 = vst [vmem:[%s252] sm:$0xff] %v545
      %562 = vst [vmem:[%s252 + $0x8] sm:$0xff] %v546
      %563 = vst [vmem:[%s252 + $0x10] sm:$0xff] %v547
      %564 = vst [vmem:[%s252 + $0x18] sm:$0xff] %v548
      %565 = vst [vmem:[%s252 + $0x20] sm:$0xff] %v549
      %566 = vst [vmem:[%s252 + $0x28] sm:$0xff] %v550
      %567 = vst [vmem:[%s252 + $0x30] sm:$0xff] %v551
      %568 = vst [vmem:[%s252 + $0x38] sm:$0xff] %v552
      %569 = vst [vmem:[%s252 + $0x40] sm:$0xff] %v553
      %570 = vst [vmem:[%s252 + $0x48] sm:$0xff] %v554
      %571 = vst [vmem:[%s252 + $0x50] sm:$0xff] %v555
      %572 = vst [vmem:[%s252 + $0x58] sm:$0xff] %v556
      %573 = vst [vmem:[%s252 + $0x60] sm:$0xff] %v557
      %574 = vst [vmem:[%s252 + $0x68] sm:$0xff] %v558
      %575 = vst [vmem:[%s252 + $0x70] sm:$0xff] %v559
      %576 = vst [vmem:[%s252 + $0x78] sm:$0xff] %v560
      // Predicated region
      $region41: #{encoder_forward.5} parent=35 // pred_check
        %p577 = pneg %p255
      $region42: #{encoder_forward.5} parent=35 // pred_check_branch
        %579 = sbr.rel (%p577) target = $region44
      $region43: #{encoder_forward.5} parent=35 // pred_region
        %v580 = vld [vmem:[%s246] sm:$0xff]
        %v581 = vld [vmem:[%s246 + $0x8] sm:$0xff]
        %v582 = vld [vmem:[%s246 + $0x10] sm:$0xff]
        %v583 = vld [vmem:[%s246 + $0x18] sm:$0xff]
        %v584 = vld [vmem:[%s246 + $0x20] sm:$0xff]
        %v585 = vld [vmem:[%s246 + $0x28] sm:$0xff]
        %v586 = vld [vmem:[%s246 + $0x30] sm:$0xff]
        %v587 = vld [vmem:[%s246 + $0x38] sm:$0xff]
        %v588 = vld [vmem:[%s246 + $0x40] sm:$0xff]
        %v589 = vld [vmem:[%s246 + $0x48] sm:$0xff]
        %v590 = vld [vmem:[%s246 + $0x50] sm:$0xff]
        %v591 = vld [vmem:[%s246 + $0x58] sm:$0xff]
        %v592 = vld [vmem:[%s246 + $0x60] sm:$0xff]
        %v593 = vld [vmem:[%s246 + $0x68] sm:$0xff]
        %v594 = vld [vmem:[%s246 + $0x70] sm:$0xff]
        %v595 = vld [vmem:[%s246 + $0x78] sm:$0xff]
        %v596 = vld [vmem:[%s252] sm:$0xff]
        %v597 = vld [vmem:[%s252 + $0x8] sm:$0xff]
        %v598 = vld [vmem:[%s252 + $0x10] sm:$0xff]
        %v599 = vld [vmem:[%s252 + $0x18] sm:$0xff]
        %v600 = vld [vmem:[%s252 + $0x20] sm:$0xff]
        %v601 = vld [vmem:[%s252 + $0x28] sm:$0xff]
        %v602 = vld [vmem:[%s252 + $0x30] sm:$0xff]
        %v603 = vld [vmem:[%s252 + $0x38] sm:$0xff]
        %v604 = vld [vmem:[%s252 + $0x40] sm:$0xff]
        %v605 = vld [vmem:[%s252 + $0x48] sm:$0xff]
        %v606 = vld [vmem:[%s252 + $0x50] sm:$0xff]
        %v607 = vld [vmem:[%s252 + $0x58] sm:$0xff]
        %v608 = vld [vmem:[%s252 + $0x60] sm:$0xff]
        %v609 = vld [vmem:[%s252 + $0x68] sm:$0xff]
        %v610 = vld [vmem:[%s252 + $0x70] sm:$0xff]
        %v611 = vld [vmem:[%s252 + $0x78] sm:$0xff]
        %613 = vset.pattern.permute.xlu0 0
        %614 = vperm.xlu0 %613, %v580
        %v615 = vpop.permute.xlu0 %614
        %618 = vset.pattern.permute.xlu0 0
        %619 = vperm.xlu0 %618, %v581
        %v620 = vpop.permute.xlu0 %619
        %623 = vset.pattern.permute.xlu0 0
        %624 = vperm.xlu0 %623, %v582
        %v625 = vpop.permute.xlu0 %624
        %628 = vset.pattern.permute.xlu0 0
        %629 = vperm.xlu0 %628, %v583
        %v630 = vpop.permute.xlu0 %629
        %633 = vset.pattern.permute.xlu0 0
        %634 = vperm.xlu0 %633, %v584
        %v635 = vpop.permute.xlu0 %634
        %638 = vset.pattern.permute.xlu0 0
        %639 = vperm.xlu0 %638, %v585
        %v640 = vpop.permute.xlu0 %639
        %643 = vset.pattern.permute.xlu0 0
        %644 = vperm.xlu0 %643, %v586
        %v645 = vpop.permute.xlu0 %644
        %648 = vset.pattern.permute.xlu0 0
        %649 = vperm.xlu0 %648, %v587
        %v650 = vpop.permute.xlu0 %649
        %653 = vset.pattern.permute.xlu0 0
        %654 = vperm.xlu0 %653, %v588
        %v655 = vpop.permute.xlu0 %654
        %658 = vset.pattern.permute.xlu0 0
        %659 = vperm.xlu0 %658, %v589
        %v660 = vpop.permute.xlu0 %659
        %663 = vset.pattern.permute.xlu0 0
        %664 = vperm.xlu0 %663, %v590
        %v665 = vpop.permute.xlu0 %664
        %668 = vset.pattern.permute.xlu0 0
        %669 = vperm.xlu0 %668, %v591
        %v670 = vpop.permute.xlu0 %669
        %673 = vset.pattern.permute.xlu0 0
        %674 = vperm.xlu0 %673, %v592
        %v675 = vpop.permute.xlu0 %674
        %678 = vset.pattern.permute.xlu0 0
        %679 = vperm.xlu0 %678, %v593
        %v680 = vpop.permute.xlu0 %679
        %683 = vset.pattern.permute.xlu0 0
        %684 = vperm.xlu0 %683, %v594
        %v685 = vpop.permute.xlu0 %684
        %688 = vset.pattern.permute.xlu0 0
        %689 = vperm.xlu0 %688, %v595
        %v690 = vpop.permute.xlu0 %689
        %v692 = vmul.f32 %v615, %v596
        %v693 = vmul.f32 %v620, %v597
        %v694 = vmul.f32 %v625, %v598
        %v695 = vmul.f32 %v630, %v599
        %v696 = vmul.f32 %v635, %v600
        %v697 = vmul.f32 %v640, %v601
        %v698 = vmul.f32 %v645, %v602
        %v699 = vmul.f32 %v650, %v603
        %v700 = vmul.f32 %v655, %v604
        %v701 = vmul.f32 %v660, %v605
        %v702 = vmul.f32 %v665, %v606
        %v703 = vmul.f32 %v670, %v607
        %v704 = vmul.f32 %v675, %v608
        %v705 = vmul.f32 %v680, %v609
        %v706 = vmul.f32 %v685, %v610
        %v707 = vmul.f32 %v690, %v611
        %v708 = vld [vmem:[%s3] sm:$0x1]
        %v710 = vlaneseq
        %v711 = vshrl.u32 %v710, 7
        %v712 = vsub.s32 0, %v711
        %v713 = vrot.slane %v708, %v712
        %v715 = vadd.f32 %v692, %v713
        %v716 = vadd.f32 %v693, %v713
        %v717 = vadd.f32 %v694, %v713
        %v718 = vadd.f32 %v695, %v713
        %v719 = vadd.f32 %v696, %v713
        %v720 = vadd.f32 %v697, %v713
        %v721 = vadd.f32 %v698, %v713
        %v722 = vadd.f32 %v699, %v713
        %v723 = vadd.f32 %v700, %v713
        %v724 = vadd.f32 %v701, %v713
        %v725 = vadd.f32 %v702, %v713
        %v726 = vadd.f32 %v703, %v713
        %v727 = vadd.f32 %v704, %v713
        %v728 = vadd.f32 %v705, %v713
        %v729 = vadd.f32 %v706, %v713
        %v730 = vadd.f32 %v707, %v713
        %v731 = vmax.f32 %v715, 0.0
        %v732 = vmax.f32 %v716, 0.0
        %v733 = vmax.f32 %v717, 0.0
        %v734 = vmax.f32 %v718, 0.0
        %v735 = vmax.f32 %v719, 0.0
        %v736 = vmax.f32 %v720, 0.0
        %v737 = vmax.f32 %v721, 0.0
        %v738 = vmax.f32 %v722, 0.0
        %v739 = vmax.f32 %v723, 0.0
        %v740 = vmax.f32 %v724, 0.0
        %v741 = vmax.f32 %v725, 0.0
        %v742 = vmax.f32 %v726, 0.0
        %v743 = vmax.f32 %v727, 0.0
        %v744 = vmax.f32 %v728, 0.0
        %v745 = vmax.f32 %v729, 0.0
        %v746 = vmax.f32 %v730, 0.0
        %747 = vst [vmem:[%s252] sm:$0xff] %v731
        %748 = vst [vmem:[%s252 + $0x8] sm:$0xff] %v732
        %749 = vst [vmem:[%s252 + $0x10] sm:$0xff] %v733
        %750 = vst [vmem:[%s252 + $0x18] sm:$0xff] %v734
        %751 = vst [vmem:[%s252 + $0x20] sm:$0xff] %v735
        %752 = vst [vmem:[%s252 + $0x28] sm:$0xff] %v736
        %753 = vst [vmem:[%s252 + $0x30] sm:$0xff] %v737
        %754 = vst [vmem:[%s252 + $0x38] sm:$0xff] %v738
        %755 = vst [vmem:[%s252 + $0x40] sm:$0xff] %v739
        %756 = vst [vmem:[%s252 + $0x48] sm:$0xff] %v740
        %757 = vst [vmem:[%s252 + $0x50] sm:$0xff] %v741
        %758 = vst [vmem:[%s252 + $0x58] sm:$0xff] %v742
        %759 = vst [vmem:[%s252 + $0x60] sm:$0xff] %v743
        %760 = vst [vmem:[%s252 + $0x68] sm:$0xff] %v744
        %761 = vst [vmem:[%s252 + $0x70] sm:$0xff] %v745
        %762 = vst [vmem:[%s252 + $0x78] sm:$0xff] %v746
      $region44: #{encoder_forward.5} parent=35 // pred_fallthru
        _
      %s763 = smul.u32 16, %s19
      %p764 = scmp.lt.s32.totalorder %s763, 31
      %s765 = scalar_select %p764, %s763, 31
      %s766 = smul.addr %s765, 8
      %s767 = scalar_lea.vmem %s4, %s766
      // Predicated region
      $region45: #{encoder_forward.5} parent=35 // pred_check
        %p768 = pneg %p141
      $region46: #{encoder_forward.5} parent=35 // pred_check_branch
        %770 = sbr.rel (%p768) target = $region48
      $region47: #{encoder_forward.5} parent=35 // pred_region
        %s771 = smul.u32 16, %s19
      $region48: #{encoder_forward.5} parent=35 // pred_fallthru
        _
    $region36: #{encoder_forward.5} parent=5 // pred_fallthru
      _
    %p772 = scmp.le.s32.totalorder 2, %s10
    // Predicated region
    $region49: #{encoder_forward.5} parent=5 // pred_check
      %p773 = pneg %p772
    $region50: #{encoder_forward.5} parent=5 // pred_check_branch
      %775 = sbr.rel (%p773) target = $region52
    $region51: #{encoder_forward.5} parent=5 // pred_region
      %s776 = ssub.s32 %s10, 2
      // Predicated region
      $region53: #{encoder_forward.5} parent=51 // pred_check
        %p777 = pneg %p147
      $region54: #{encoder_forward.5} parent=51 // pred_check_branch
        %779 = sbr.rel (%p777) target = $region56
      $region55: #{encoder_forward.5} parent=51 // pred_region
        %s780 = smul.u32 16, %s21
        %p781 = scmp.lt.s32.totalorder %s780, 31
        %s782 = scalar_select %p781, %s780, 31
        %s783 = smul.addr %s782, 8
        %s784 = scalar_lea.vmem %s4, %s783
      $region56: #{encoder_forward.5} parent=51 // pred_fallthru
        _
    $region52: #{encoder_forward.5} parent=5 // pred_fallthru
      _
  $region6: #{encoder_forward.5} parent=0 // loop_footer
    %s14 = sadd.s32 1, %s10
  $region7: #{encoder_forward.5} parent=0 // loop_footer_branch
    %9 = sbr.rel target = $region3
  $region8: #{encoder_forward.5} parent=0 // loop_exit
    _

</llo_original>
